<compile_context>
chip_gen: v5e
topology: v5e:2x2
jax: 0.10.0
libtpu: 0.0.40
codegen_flags: <defaults>
</compile_context>

<pallas_src>
import functools

import jax
import jax.numpy as jnp
from jax import lax
from jax.experimental import pallas as pl
from jax.experimental.pallas import tpu as pltpu


# ---------------------------------------------------------------------------
# in-kernel helpers (traced inside the Pallas kernel body)
# ---------------------------------------------------------------------------
def _layer_norm(x, w, eps=1e-5):
    # x: (T, C) f32, w: (1, C) f32; F.layer_norm semantics (biased var), no bias.
    mu = jnp.mean(x, axis=-1, keepdims=True)
    var = jnp.mean((x - mu) * (x - mu), axis=-1, keepdims=True)
    return (x - mu) * lax.rsqrt(var + eps) * w


def _mha(h, wqkv, wo_heads, bo, num_heads, dim_head):
    """Multi-head attention on one (T, C) tile, all heads batched.

    wqkv:     (C, 3C) bf16 fused projection (query scale already folded into wq part).
    wo_heads: (H, D, C) bf16 (output projection pre-split per head).
    bo:       (1, C) f32.
    """
    C = num_heads * dim_head
    hb = h.astype(jnp.bfloat16)
    # Single fused full-width MXU matmul for q, k, v of all heads at once.
    qkv = jnp.dot(hb, wqkv, preferred_element_type=jnp.float32)   # (T, 3C) f32

    def heads(base):
        # (T, 3C) -> (H, T, D): static lane slices, stacked along the MAJOR axis
        # (no lane-axis concatenate, no in-kernel reshape of the minor dims).
        return jnp.stack(
            [qkv[:, base + i * dim_head: base + (i + 1) * dim_head]
             for i in range(num_heads)],
            axis=0).astype(jnp.bfloat16)

    q3, k3, v3 = heads(0), heads(C), heads(2 * C)               # (H, T, D) bf16

    # Scores: one batched contraction over D, batch dim H -> (H, Tq, Tk) f32.
    s = lax.dot_general(q3, k3, (((2,), (2,)), ((0,), (0,))),
                        preferred_element_type=jnp.float32)
    m = jnp.max(s, axis=-1, keepdims=True)
    e = jnp.exp(s - m)
    p = e * pl.reciprocal(jnp.sum(e, axis=-1, keepdims=True), approx=True)

    # attn @ V: batch H, contract over Tk -> (H, Tq, D) f32.
    y = lax.dot_general(p.astype(jnp.bfloat16), v3,
                        (((2,), (1,)), ((0,), (0,))),
                        preferred_element_type=jnp.float32)
    # Output projection per head, then merge heads by summing the major axis:
    # (H, Tq, D) @ (H, D, C) -> (H, Tq, C) -> sum_H -> (Tq, C).
    o = lax.dot_general(y.astype(jnp.bfloat16), wo_heads,
                        (((2,), (1,)), ((0,), (0,))),
                        preferred_element_type=jnp.float32)
    return jnp.sum(o, axis=0) + bo


# ---------------------------------------------------------------------------
# fused decoder-stack kernel: grid = (batch, layer)
# ---------------------------------------------------------------------------
def decoder_stack_kernel(x_ref,
                         ln1_ref, wqkv1_ref, wo1_ref, bo1_ref,
                         ln2_ref, wqkv2_ref, wo2_ref, bo2_ref,
                         ln3_ref, w1_ref, b1_ref, w2_ref, b2_ref,
                         onorm_ref,
                         out_ref, x_acc,
                         *, num_heads, dim_head):
    layer = pl.program_id(1)
    n_layers = pl.num_programs(1)

    # Load the embedded tokens into the resident f32 accumulator at the first layer.
    @pl.when(layer == 0)
    def _():
        x_acc[...] = x_ref[0]

    x = x_acc[...]                                             # (T, C) f32

    # --- self-attention sub-block ---
    h1 = _layer_norm(x, ln1_ref[0])
    x = x + _mha(h1, wqkv1_ref[0], wo1_ref[0], bo1_ref[0], num_heads, dim_head)

    # --- "cross"-attention sub-block (source bug: context ignored) ---
    h2 = _layer_norm(x, ln2_ref[0])
    x = x + _mha(h2, wqkv2_ref[0], wo2_ref[0], bo2_ref[0], num_heads, dim_head)

    # --- MLP sub-block (source quirk: net applied to its raw input ln3(x)) ---
    h3 = _layer_norm(x, ln3_ref[0])
    ff = jnp.dot(h3.astype(jnp.bfloat16), w1_ref[0],
                 preferred_element_type=jnp.float32) + b1_ref[0]
    ff = jnp.maximum(ff, 0.0)
    ff = jnp.dot(ff.astype(jnp.bfloat16), w2_ref[0],
                 preferred_element_type=jnp.float32) + b2_ref[0]
    x = x + h3 + ff

    x_acc[...] = x

    # Fused final output LayerNorm — only the last layer writes the output block.
    @pl.when(layer == n_layers - 1)
    def _():
        out_ref[0] = _layer_norm(x, onorm_ref[...]).astype(out_ref.dtype)


# ---------------------------------------------------------------------------
# parameter packing: stack per-layer weights, cast matmul operands to bf16,
# fuse q/k/v into one projection (query scale folded in), pre-split the output
# projection per head.
# ---------------------------------------------------------------------------
def pack_params(params, num_heads, dim_head):
    layers = params["layers"]
    L = len(layers)
    C = layers[0]["wq1"].shape[0]
    scale = dim_head ** -0.5

    def stack(name):
        return jnp.stack([lp[name] for lp in layers], axis=0)

    def bf16(a):
        return a.astype(jnp.bfloat16)

    def fused_qkv(pre):
        return jnp.stack(
            [jnp.concatenate([lp[f"wq{pre}"] * scale, lp[f"wk{pre}"], lp[f"wv{pre}"]],
                             axis=-1)
             for lp in layers], axis=0)                                   # (L, C, 3C)

    return {
        "ln1": stack("ln1"), "ln2": stack("ln2"), "ln3": stack("ln3"),    # (L,1,C) f32
        "wqkv1": bf16(fused_qkv(1)),
        "wo1": bf16(stack("wo1").reshape(L, num_heads, dim_head, C)),
        "bo1": stack("bo1"),
        "wqkv2": bf16(fused_qkv(2)),
        "wo2": bf16(stack("wo2").reshape(L, num_heads, dim_head, C)),
        "bo2": stack("bo2"),
        "w1": bf16(stack("w1")), "b1": stack("b1"),
        "w2": bf16(stack("w2")), "b2": stack("b2"),
        "onorm": params["output_norm"],                                    # (1,C) f32
    }


# ---------------------------------------------------------------------------
# wrapper
# ---------------------------------------------------------------------------
def decoder_forward(tokens, context, params, num_heads, dim_head):
    del context  # source bug: CrossAttention never actually uses it.
    # Embedding lookup = plain-JAX glue (gather); everything else runs in the kernel.
    x = jnp.take(params["tok_emb"], tokens, axis=0).astype(jnp.float32)   # (B,T,C)
    pk = pack_params(params, num_heads, dim_head)

    B, T, C = x.shape
    L = pk["wqkv1"].shape[0]

    def layer_spec(arr):
        tail = arr.shape[1:]
        nd = len(tail)
        return pl.BlockSpec((1,) + tail,
                            lambda b, l, _nd=nd: (l,) + (0,) * _nd)

    weight_args = (pk["ln1"], pk["wqkv1"], pk["wo1"], pk["bo1"],
                   pk["ln2"], pk["wqkv2"], pk["wo2"], pk["bo2"],
                   pk["ln3"], pk["w1"], pk["b1"], pk["w2"], pk["b2"])
    weight_specs = [layer_spec(w) for w in weight_args]

    kernel = functools.partial(decoder_stack_kernel,
                               num_heads=num_heads, dim_head=dim_head)

    return pl.pallas_call(
        kernel,
        out_shape=jax.ShapeDtypeStruct((B, T, C), jnp.float32),
        grid_spec=pltpu.PrefetchScalarGridSpec(
            num_scalar_prefetch=0,
            grid=(B, L),                              # batch parallel, layers sequential
            in_specs=[pl.BlockSpec((1, T, C), lambda b, l: (b, 0, 0))]    # x
                     + weight_specs                                        # per-layer
                     + [pl.BlockSpec((1, C), lambda b, l: (0, 0))],        # output norm
            out_specs=pl.BlockSpec((1, T, C), lambda b, l: (b, 0, 0)),
            scratch_shapes=[pltpu.VMEM((T, C), jnp.float32)],              # resident x
        ),
        compiler_params=pltpu.CompilerParams(
            dimension_semantics=("parallel", "arbitrary"),
            # Toy shapes are tiny; for real shapes budget this per generation
            # (v7x has only 64 MiB physical VMEM vs 128 MiB on v5e/v6e).
            vmem_limit_bytes=32 * 1024 * 1024,
        ),
    )(x, *weight_args, pk["onorm"])


# ---------------------------------------------------------------------------
# pure-JAX f32 reference (mirrors the PyTorch module, quirks included)
# ---------------------------------------------------------------------------
def _ref_ln(x, w, eps=1e-5):
    mu = x.mean(-1, keepdims=True)
    var = ((x - mu) ** 2).mean(-1, keepdims=True)
    return (x - mu) / jnp.sqrt(var + eps) * w


def _ref_attn(h, wq, wk, wv, wo, bo, H, D):
    B, T, C = h.shape

    def rs(a):
        return a.reshape(B, T, H, D).transpose(0, 2, 1, 3)

    q = rs(h @ wq) * (D ** -0.5)
    k = rs(h @ wk)
    v = rs(h @ wv)
    s = jnp.einsum("bhid,bhjd->bhij", q, k)
    a = jax.nn.softmax(s, axis=-1)
    y = jnp.einsum("bhij,bhjd->bhid", a, v)
    y = y.transpose(0, 2, 1, 3).reshape(B, T, C)
    return y @ wo + bo


def decoder_forward_ref(tokens, context, params, H, D):
    x = jnp.take(params["tok_emb"], tokens, axis=0)
    del context
    for p in params["layers"]:
        h1 = _ref_ln(x, p["ln1"])
        x = x + _ref_attn(h1, p["wq1"], p["wk1"], p["wv1"], p["wo1"], p["bo1"], H, D)
        h2 = _ref_ln(x, p["ln2"])
        x = x + _ref_attn(h2, p["wq2"], p["wk2"], p["wv2"], p["wo2"], p["bo2"], H, D)
        h3 = _ref_ln(x, p["ln3"])
        ff = jnp.maximum(h3 @ p["w1"] + p["b1"], 0.0) @ p["w2"] + p["b2"]
        x = x + (h3 + ff)
    return _ref_ln(x, params["output_norm"])


# ---------------------------------------------------------------------------
# deterministic parameter construction (f32 master copies, (in, out) layout)
# ---------------------------------------------------------------------------
def init_params(key, vocab_size, embed_dim, num_layers, mlp_dim):
    C, M = embed_dim, mlp_dim

    def nrm(k, shape, scale=0.02):
        return (scale * jax.random.normal(k, shape)).astype(jnp.float32)

    keys = jax.random.split(key, 1 + num_layers)
    params = {"tok_emb": nrm(keys[0], (vocab_size, C), 1.0),
              "output_norm": jnp.ones((1, C), jnp.float32),
              "layers": []}
    for li in range(num_layers):
        lk = jax.random.split(keys[1 + li], 12)
        params["layers"].append({
            "ln1": jnp.ones((1, C), jnp.float32),
            "wq1": nrm(lk[0], (C, C)), "wk1": nrm(lk[1], (C, C)),
            "wv1": nrm(lk[2], (C, C)), "wo1": nrm(lk[3], (C, C)),
            "bo1": nrm(lk[4], (1, C)),
            "ln2": jnp.ones((1, C), jnp.float32),
            "wq2": nrm(lk[5], (C, C)), "wk2": nrm(lk[6], (C, C)),
            "wv2": nrm(lk[7], (C, C)), "wo2": nrm(lk[8], (C, C)),
            "bo2": nrm(lk[9], (1, C)),
            "ln3": jnp.ones((1, C), jnp.float32),
            "w1": nrm(lk[10], (C, M)), "b1": jnp.zeros((1, M), jnp.float32),
            "w2": nrm(lk[11], (M, C)), "b2": jnp.zeros((1, C), jnp.float32),
        })
    return params


# ---------------------------------------------------------------------------
if __name__ == "__main__":
    VOCAB, EMBED, LAYERS, HEADS, MLP_DIM = 100, 32, 2, 2, 64
    DIM_HEAD = EMBED // HEADS                      # 16, matches the source reshape
    B, T = 2, 8

    root = jax.random.PRNGKey(0)
    k_tok, k_ctx, k_par = jax.random.split(root, 3)

    tokens = jax.random.randint(k_tok, (B, T), 0, VOCAB, dtype=jnp.int32)
    context = jax.random.normal(k_ctx, (B, T, EMBED), dtype=jnp.float32)  # ignored (source bug)
    params = init_params(k_par, VOCAB, EMBED, LAYERS, MLP_DIM)

    out = decoder_forward(tokens, context, params, HEADS, DIM_HEAD)
    out = jax.block_until_ready(out)

    ref = decoder_forward_ref(tokens, context, params, HEADS, DIM_HEAD)
    assert out.shape == (B, T, EMBED)
    # Kernel uses bf16 matmul operands (f32 accumulation) + approx reciprocal in
    # softmax, so compare against the f32 reference with a bf16-appropriate tolerance.
    assert jnp.allclose(out, ref, rtol=2e-2, atol=2e-2), "mismatch vs reference"

    print("KERNEL_OK")
</pallas_src>

<mosaic_0001>
module attributes {stable_mosaic.version = 11 : i64} {
  func.func @decoder_stack_kernel(%arg0: i32, %arg1: i32, %arg2: memref<1x8x32xf32, #tpu.memory_space<vmem>>, %arg3: memref<1x1x32xf32, #tpu.memory_space<vmem>>, %arg4: memref<1x32x96xbf16, #tpu.memory_space<vmem>>, %arg5: memref<1x2x16x32xbf16, #tpu.memory_space<vmem>>, %arg6: memref<1x1x32xf32, #tpu.memory_space<vmem>>, %arg7: memref<1x1x32xf32, #tpu.memory_space<vmem>>, %arg8: memref<1x32x96xbf16, #tpu.memory_space<vmem>>, %arg9: memref<1x2x16x32xbf16, #tpu.memory_space<vmem>>, %arg10: memref<1x1x32xf32, #tpu.memory_space<vmem>>, %arg11: memref<1x1x32xf32, #tpu.memory_space<vmem>>, %arg12: memref<1x32x64xbf16, #tpu.memory_space<vmem>>, %arg13: memref<1x1x64xf32, #tpu.memory_space<vmem>>, %arg14: memref<1x64x32xbf16, #tpu.memory_space<vmem>>, %arg15: memref<1x1x32xf32, #tpu.memory_space<vmem>>, %arg16: memref<1x32xf32, #tpu.memory_space<vmem>>, %arg17: memref<1x8x32xf32, #tpu.memory_space<vmem>>, %arg18: memref<8x32xf32, #tpu.memory_space<vmem>>) attributes {dimension_semantics = [#tpu.dimension_semantics<parallel>, #tpu.dimension_semantics<arbitrary>], iteration_bounds = array<i64: 2, 2>, scalar_prefetch = 0 : i64, scratch_operands = 1 : i64, tpu.core_type = #tpu.core_type<tc>, window_params = [{transform_indices = @transform_0, window_bounds = array<i64: 1, 8, 32>}, {transform_indices = @transform_1, window_bounds = array<i64: 1, 1, 32>}, {transform_indices = @transform_2, window_bounds = array<i64: 1, 32, 96>}, {transform_indices = @transform_3, window_bounds = array<i64: 1, 2, 16, 32>}, {transform_indices = @transform_4, window_bounds = array<i64: 1, 1, 32>}, {transform_indices = @transform_5, window_bounds = array<i64: 1, 1, 32>}, {transform_indices = @transform_6, window_bounds = array<i64: 1, 32, 96>}, {transform_indices = @transform_7, window_bounds = array<i64: 1, 2, 16, 32>}, {transform_indices = @transform_8, window_bounds = array<i64: 1, 1, 32>}, {transform_indices = @transform_9, window_bounds = array<i64: 1, 1, 32>}, {transform_indices = @transform_10, window_bounds = array<i64: 1, 32, 64>}, {transform_indices = @transform_11, window_bounds = array<i64: 1, 1, 64>}, {transform_indices = @transform_12, window_bounds = array<i64: 1, 64, 32>}, {transform_indices = @transform_13, window_bounds = array<i64: 1, 1, 32>}, {pipeline_mode = #tpu.pipeline_mode<synchronous>, transform_indices = @transform_14, window_bounds = array<i64: 1, 32>}, {transform_indices = @transform_15, window_bounds = array<i64: 1, 8, 32>}]} {
    %c0_i32 = arith.constant 0 : i32
    %0 = arith.cmpi eq, %arg1, %c0_i32 : i32
    %1 = arith.extui %0 : i1 to i32
    %c0_i32_0 = arith.constant 0 : i32
    %2 = arith.cmpi ne, %1, %c0_i32_0 : i32
    scf.if %2 {
      %c0_77 = arith.constant 0 : index
      %c0_78 = arith.constant 0 : index
      %c0_79 = arith.constant 0 : index
      %190 = vector.load %arg2[%c0_77, %c0_78, %c0_79] : memref<1x8x32xf32, #tpu.memory_space<vmem>>, vector<1x8x32xf32>
      %191 = vector.shape_cast %190 : vector<1x8x32xf32> to vector<8x32xf32>
      %c0_80 = arith.constant 0 : index
      %c0_81 = arith.constant 0 : index
      %192 = vector.load %arg18[%c0_80, %c0_81] : memref<8x32xf32, #tpu.memory_space<vmem>>, vector<8x32xf32>
      tpu.vector_store %arg18[%c0_80, %c0_81], %191 {strides = array<i32>} : memref<8x32xf32, #tpu.memory_space<vmem>>, vector<8x32xf32>,
    } else {
    }
    %c0 = arith.constant 0 : index
    %c0_1 = arith.constant 0 : index
    %3 = vector.load %arg18[%c0, %c0_1] : memref<8x32xf32, #tpu.memory_space<vmem>>, vector<8x32xf32>
    %c0_2 = arith.constant 0 : index
    %c0_3 = arith.constant 0 : index
    %c0_4 = arith.constant 0 : index
    %4 = vector.load %arg3[%c0_2, %c0_3, %c0_4] : memref<1x1x32xf32, #tpu.memory_space<vmem>>, vector<1x1x32xf32>
    %5 = vector.shape_cast %4 : vector<1x1x32xf32> to vector<1x32xf32>
    %cst = arith.constant dense<0.000000e+00> : vector<8xf32>
    %6 = vector.multi_reduction <add>, %3, %cst [1] : vector<8x32xf32> to vector<8xf32>
    %7 = vector.shape_cast %6 : vector<8xf32> to vector<8x1xf32>
    %cst_5 = arith.constant 3.200000e+01 : f32
    %8 = vector.broadcast %cst_5 : f32 to vector<8x1xf32>
    %9 = arith.divf %7, %8 : vector<8x1xf32>
    %10 = vector.broadcast %9 : vector<8x1xf32> to vector<8x32xf32>
    %11 = arith.subf %3, %10 : vector<8x32xf32>
    %12 = vector.broadcast %9 : vector<8x1xf32> to vector<8x32xf32>
    %13 = arith.subf %3, %12 : vector<8x32xf32>
    %14 = arith.mulf %11, %13 : vector<8x32xf32>
    %cst_6 = arith.constant dense<0.000000e+00> : vector<8xf32>
    %15 = vector.multi_reduction <add>, %14, %cst_6 [1] : vector<8x32xf32> to vector<8xf32>
    %16 = vector.shape_cast %15 : vector<8xf32> to vector<8x1xf32>
    %cst_7 = arith.constant 3.200000e+01 : f32
    %17 = vector.broadcast %cst_7 : f32 to vector<8x1xf32>
    %18 = arith.divf %16, %17 : vector<8x1xf32>
    %19 = vector.broadcast %9 : vector<8x1xf32> to vector<8x32xf32>
    %20 = arith.subf %3, %19 : vector<8x32xf32>
    %cst_8 = arith.constant 9.99999974E-6 : f32
    %21 = vector.broadcast %cst_8 : f32 to vector<8x1xf32>
    %22 = arith.addf %18, %21 : vector<8x1xf32>
    %23 = math.rsqrt %22 : vector<8x1xf32>
    %24 = vector.broadcast %23 : vector<8x1xf32> to vector<8x32xf32>
    %25 = arith.mulf %20, %24 : vector<8x32xf32>
    %26 = vector.broadcast %5 : vector<1x32xf32> to vector<8x32xf32>
    %27 = arith.mulf %25, %26 : vector<8x32xf32>
    %c0_9 = arith.constant 0 : index
    %c0_10 = arith.constant 0 : index
    %c0_11 = arith.constant 0 : index
    %28 = vector.load %arg4[%c0_9, %c0_10, %c0_11] : memref<1x32x96xbf16, #tpu.memory_space<vmem>>, vector<1x32x96xbf16>
    %29 = vector.shape_cast %28 : vector<1x32x96xbf16> to vector<32x96xbf16>
    %c0_12 = arith.constant 0 : index
    %c0_13 = arith.constant 0 : index
    %c0_14 = arith.constant 0 : index
    %c0_15 = arith.constant 0 : index
    %30 = vector.load %arg5[%c0_12, %c0_13, %c0_14, %c0_15] : memref<1x2x16x32xbf16, #tpu.memory_space<vmem>>, vector<1x2x16x32xbf16>
    %31 = vector.shape_cast %30 : vector<1x2x16x32xbf16> to vector<2x16x32xbf16>
    %c0_16 = arith.constant 0 : index
    %c0_17 = arith.constant 0 : index
    %c0_18 = arith.constant 0 : index
    %32 = vector.load %arg6[%c0_16, %c0_17, %c0_18] : memref<1x1x32xf32, #tpu.memory_space<vmem>>, vector<1x1x32xf32>
    %33 = vector.shape_cast %32 : vector<1x1x32xf32> to vector<1x32xf32>
    %34 = arith.truncf %27 : vector<8x32xf32> to vector<8x32xbf16>
    %cst_19 = arith.constant dense<0.000000e+00> : vector<8x96xf32>
    %35 = tpu.matmul %34, %29, %cst_19 {dimension_numbers = #tpu.dot_dimension_numbers<[1], [0], [0], [1], [0, 0, 1, 1], [], []>} : vector<8x32xbf16>, vector<32x96xbf16>, vector<8x96xf32> -> vector<8x96xf32>
    %36 = vector.extract_strided_slice %35 {offsets = [0, 0], sizes = [8, 16], strides = [1, 1]} : vector<8x96xf32> to vector<8x16xf32>
    %37 = vector.extract_strided_slice %35 {offsets = [0, 16], sizes = [8, 16], strides = [1, 1]} : vector<8x96xf32> to vector<8x16xf32>
    %38 = vector.shape_cast %36 : vector<8x16xf32> to vector<1x8x16xf32>
    %39 = vector.shape_cast %37 : vector<8x16xf32> to vector<1x8x16xf32>
    %40 = tpu.concatenate %38, %39 in 0 : vector<1x8x16xf32>, vector<1x8x16xf32> -> vector<2x8x16xf32>
    %41 = arith.truncf %40 : vector<2x8x16xf32> to vector<2x8x16xbf16>
    %42 = vector.extract_strided_slice %35 {offsets = [0, 32], sizes = [8, 16], strides = [1, 1]} : vector<8x96xf32> to vector<8x16xf32>
    %43 = vector.extract_strided_slice %35 {offsets = [0, 48], sizes = [8, 16], strides = [1, 1]} : vector<8x96xf32> to vector<8x16xf32>
    %44 = vector.shape_cast %42 : vector<8x16xf32> to vector<1x8x16xf32>
    %45 = vector.shape_cast %43 : vector<8x16xf32> to vector<1x8x16xf32>
    %46 = tpu.concatenate %44, %45 in 0 : vector<1x8x16xf32>, vector<1x8x16xf32> -> vector<2x8x16xf32>
    %47 = arith.truncf %46 : vector<2x8x16xf32> to vector<2x8x16xbf16>
    %48 = vector.extract_strided_slice %35 {offsets = [0, 64], sizes = [8, 16], strides = [1, 1]} : vector<8x96xf32> to vector<8x16xf32>
    %49 = vector.extract_strided_slice %35 {offsets = [0, 80], sizes = [8, 16], strides = [1, 1]} : vector<8x96xf32> to vector<8x16xf32>
    %50 = vector.shape_cast %48 : vector<8x16xf32> to vector<1x8x16xf32>
    %51 = vector.shape_cast %49 : vector<8x16xf32> to vector<1x8x16xf32>
    %52 = tpu.concatenate %50, %51 in 0 : vector<1x8x16xf32>, vector<1x8x16xf32> -> vector<2x8x16xf32>
    %53 = arith.truncf %52 : vector<2x8x16xf32> to vector<2x8x16xbf16>
    %cst_20 = arith.constant dense<0.000000e+00> : vector<2x8x8xf32>
    %54 = tpu.matmul %41, %47, %cst_20 {dimension_numbers = #tpu.dot_dimension_numbers<[2], [2], [1], [1], [0, 0, 0, 1, 1, 1], [0], [0]>} : vector<2x8x16xbf16>, vector<2x8x16xbf16>, vector<2x8x8xf32> -> vector<2x8x8xf32>
    %cst_21 = arith.constant dense<0xFF800000> : vector<2x8xf32>
    %55 = vector.multi_reduction <maximumf>, %54, %cst_21 [2] : vector<2x8x8xf32> to vector<2x8xf32>
    %56 = vector.shape_cast %55 : vector<2x8xf32> to vector<2x8x1xf32>
    %57 = vector.broadcast %56 : vector<2x8x1xf32> to vector<2x8x8xf32>
    %58 = arith.subf %54, %57 : vector<2x8x8xf32>
    %59 = math.exp %58 : vector<2x8x8xf32>
    %cst_22 = arith.constant dense<0.000000e+00> : vector<2x8xf32>
    %60 = vector.multi_reduction <add>, %59, %cst_22 [2] : vector<2x8x8xf32> to vector<2x8xf32>
    %61 = vector.shape_cast %60 : vector<2x8xf32> to vector<2x8x1xf32>
    %62 = tpu.reciprocal %61 {approx = true} : vector<2x8x1xf32> -> vector<2x8x1xf32>
    %63 = vector.broadcast %62 : vector<2x8x1xf32> to vector<2x8x8xf32>
    %64 = arith.mulf %59, %63 : vector<2x8x8xf32>
    %65 = arith.truncf %64 : vector<2x8x8xf32> to vector<2x8x8xbf16>
    %cst_23 = arith.constant dense<0.000000e+00> : vector<2x8x16xf32>
    %66 = tpu.matmul %65, %53, %cst_23 {dimension_numbers = #tpu.dot_dimension_numbers<[2], [1], [1], [2], [0, 0, 0, 1, 1, 2], [0], [0]>} : vector<2x8x8xbf16>, vector<2x8x16xbf16>, vector<2x8x16xf32> -> vector<2x8x16xf32>
    %67 = arith.truncf %66 : vector<2x8x16xf32> to vector<2x8x16xbf16>
    %cst_24 = arith.constant dense<0.000000e+00> : vector<2x8x32xf32>
    %68 = tpu.matmul %67, %31, %cst_24 {dimension_numbers = #tpu.dot_dimension_numbers<[2], [1], [1], [2], [0, 0, 0, 1, 1, 2], [0], [0]>} : vector<2x8x16xbf16>, vector<2x16x32xbf16>, vector<2x8x32xf32> -> vector<2x8x32xf32>
    %cst_25 = arith.constant dense<0.000000e+00> : vector<8x32xf32>
    %69 = vector.multi_reduction <add>, %68, %cst_25 [0] : vector<2x8x32xf32> to vector<8x32xf32>
    %70 = vector.broadcast %33 : vector<1x32xf32> to vector<8x32xf32>
    %71 = arith.addf %69, %70 : vector<8x32xf32>
    %72 = arith.addf %3, %71 : vector<8x32xf32>
    %c0_26 = arith.constant 0 : index
    %c0_27 = arith.constant 0 : index
    %c0_28 = arith.constant 0 : index
    %73 = vector.load %arg7[%c0_26, %c0_27, %c0_28] : memref<1x1x32xf32, #tpu.memory_space<vmem>>, vector<1x1x32xf32>
    %74 = vector.shape_cast %73 : vector<1x1x32xf32> to vector<1x32xf32>
    %cst_29 = arith.constant dense<0.000000e+00> : vector<8xf32>
    %75 = vector.multi_reduction <add>, %72, %cst_29 [1] : vector<8x32xf32> to vector<8xf32>
    %76 = vector.shape_cast %75 : vector<8xf32> to vector<8x1xf32>
    %cst_30 = arith.constant 3.200000e+01 : f32
    %77 = vector.broadcast %cst_30 : f32 to vector<8x1xf32>
    %78 = arith.divf %76, %77 : vector<8x1xf32>
    %79 = vector.broadcast %78 : vector<8x1xf32> to vector<8x32xf32>
    %80 = arith.subf %72, %79 : vector<8x32xf32>
    %81 = vector.broadcast %78 : vector<8x1xf32> to vector<8x32xf32>
    %82 = arith.subf %72, %81 : vector<8x32xf32>
    %83 = arith.mulf %80, %82 : vector<8x32xf32>
    %cst_31 = arith.constant dense<0.000000e+00> : vector<8xf32>
    %84 = vector.multi_reduction <add>, %83, %cst_31 [1] : vector<8x32xf32> to vector<8xf32>
    %85 = vector.shape_cast %84 : vector<8xf32> to vector<8x1xf32>
    %cst_32 = arith.constant 3.200000e+01 : f32
    %86 = vector.broadcast %cst_32 : f32 to vector<8x1xf32>
    %87 = arith.divf %85, %86 : vector<8x1xf32>
    %88 = vector.broadcast %78 : vector<8x1xf32> to vector<8x32xf32>
    %89 = arith.subf %72, %88 : vector<8x32xf32>
    %cst_33 = arith.constant 9.99999974E-6 : f32
    %90 = vector.broadcast %cst_33 : f32 to vector<8x1xf32>
    %91 = arith.addf %87, %90 : vector<8x1xf32>
    %92 = math.rsqrt %91 : vector<8x1xf32>
    %93 = vector.broadcast %92 : vector<8x1xf32> to vector<8x32xf32>
    %94 = arith.mulf %89, %93 : vector<8x32xf32>
    %95 = vector.broadcast %74 : vector<1x32xf32> to vector<8x32xf32>
    %96 = arith.mulf %94, %95 : vector<8x32xf32>
    %c0_34 = arith.constant 0 : index
    %c0_35 = arith.constant 0 : index
    %c0_36 = arith.constant 0 : index
    %97 = vector.load %arg8[%c0_34, %c0_35, %c0_36] : memref<1x32x96xbf16, #tpu.memory_space<vmem>>, vector<1x32x96xbf16>
    %98 = vector.shape_cast %97 : vector<1x32x96xbf16> to vector<32x96xbf16>
    %c0_37 = arith.constant 0 : index
    %c0_38 = arith.constant 0 : index
    %c0_39 = arith.constant 0 : index
    %c0_40 = arith.constant 0 : index
    %99 = vector.load %arg9[%c0_37, %c0_38, %c0_39, %c0_40] : memref<1x2x16x32xbf16, #tpu.memory_space<vmem>>, vector<1x2x16x32xbf16>
    %100 = vector.shape_cast %99 : vector<1x2x16x32xbf16> to vector<2x16x32xbf16>
    %c0_41 = arith.constant 0 : index
    %c0_42 = arith.constant 0 : index
    %c0_43 = arith.constant 0 : index
    %101 = vector.load %arg10[%c0_41, %c0_42, %c0_43] : memref<1x1x32xf32, #tpu.memory_space<vmem>>, vector<1x1x32xf32>
    %102 = vector.shape_cast %101 : vector<1x1x32xf32> to vector<1x32xf32>
    %103 = arith.truncf %96 : vector<8x32xf32> to vector<8x32xbf16>
    %cst_44 = arith.constant dense<0.000000e+00> : vector<8x96xf32>
    %104 = tpu.matmul %103, %98, %cst_44 {dimension_numbers = #tpu.dot_dimension_numbers<[1], [0], [0], [1], [0, 0, 1, 1], [], []>} : vector<8x32xbf16>, vector<32x96xbf16>, vector<8x96xf32> -> vector<8x96xf32>
    %105 = vector.extract_strided_slice %104 {offsets = [0, 0], sizes = [8, 16], strides = [1, 1]} : vector<8x96xf32> to vector<8x16xf32>
    %106 = vector.extract_strided_slice %104 {offsets = [0, 16], sizes = [8, 16], strides = [1, 1]} : vector<8x96xf32> to vector<8x16xf32>
    %107 = vector.shape_cast %105 : vector<8x16xf32> to vector<1x8x16xf32>
    %108 = vector.shape_cast %106 : vector<8x16xf32> to vector<1x8x16xf32>
    %109 = tpu.concatenate %107, %108 in 0 : vector<1x8x16xf32>, vector<1x8x16xf32> -> vector<2x8x16xf32>
    %110 = arith.truncf %109 : vector<2x8x16xf32> to vector<2x8x16xbf16>
    %111 = vector.extract_strided_slice %104 {offsets = [0, 32], sizes = [8, 16], strides = [1, 1]} : vector<8x96xf32> to vector<8x16xf32>
    %112 = vector.extract_strided_slice %104 {offsets = [0, 48], sizes = [8, 16], strides = [1, 1]} : vector<8x96xf32> to vector<8x16xf32>
    %113 = vector.shape_cast %111 : vector<8x16xf32> to vector<1x8x16xf32>
    %114 = vector.shape_cast %112 : vector<8x16xf32> to vector<1x8x16xf32>
    %115 = tpu.concatenate %113, %114 in 0 : vector<1x8x16xf32>, vector<1x8x16xf32> -> vector<2x8x16xf32>
    %116 = arith.truncf %115 : vector<2x8x16xf32> to vector<2x8x16xbf16>
    %117 = vector.extract_strided_slice %104 {offsets = [0, 64], sizes = [8, 16], strides = [1, 1]} : vector<8x96xf32> to vector<8x16xf32>
    %118 = vector.extract_strided_slice %104 {offsets = [0, 80], sizes = [8, 16], strides = [1, 1]} : vector<8x96xf32> to vector<8x16xf32>
    %119 = vector.shape_cast %117 : vector<8x16xf32> to vector<1x8x16xf32>
    %120 = vector.shape_cast %118 : vector<8x16xf32> to vector<1x8x16xf32>
    %121 = tpu.concatenate %119, %120 in 0 : vector<1x8x16xf32>, vector<1x8x16xf32> -> vector<2x8x16xf32>
    %122 = arith.truncf %121 : vector<2x8x16xf32> to vector<2x8x16xbf16>
    %cst_45 = arith.constant dense<0.000000e+00> : vector<2x8x8xf32>
    %123 = tpu.matmul %110, %116, %cst_45 {dimension_numbers = #tpu.dot_dimension_numbers<[2], [2], [1], [1], [0, 0, 0, 1, 1, 1], [0], [0]>} : vector<2x8x16xbf16>, vector<2x8x16xbf16>, vector<2x8x8xf32> -> vector<2x8x8xf32>
    %cst_46 = arith.constant dense<0xFF800000> : vector<2x8xf32>
    %124 = vector.multi_reduction <maximumf>, %123, %cst_46 [2] : vector<2x8x8xf32> to vector<2x8xf32>
    %125 = vector.shape_cast %124 : vector<2x8xf32> to vector<2x8x1xf32>
    %126 = vector.broadcast %125 : vector<2x8x1xf32> to vector<2x8x8xf32>
    %127 = arith.subf %123, %126 : vector<2x8x8xf32>
    %128 = math.exp %127 : vector<2x8x8xf32>
    %cst_47 = arith.constant dense<0.000000e+00> : vector<2x8xf32>
    %129 = vector.multi_reduction <add>, %128, %cst_47 [2] : vector<2x8x8xf32> to vector<2x8xf32>
    %130 = vector.shape_cast %129 : vector<2x8xf32> to vector<2x8x1xf32>
    %131 = tpu.reciprocal %130 {approx = true} : vector<2x8x1xf32> -> vector<2x8x1xf32>
    %132 = vector.broadcast %131 : vector<2x8x1xf32> to vector<2x8x8xf32>
    %133 = arith.mulf %128, %132 : vector<2x8x8xf32>
    %134 = arith.truncf %133 : vector<2x8x8xf32> to vector<2x8x8xbf16>
    %cst_48 = arith.constant dense<0.000000e+00> : vector<2x8x16xf32>
    %135 = tpu.matmul %134, %122, %cst_48 {dimension_numbers = #tpu.dot_dimension_numbers<[2], [1], [1], [2], [0, 0, 0, 1, 1, 2], [0], [0]>} : vector<2x8x8xbf16>, vector<2x8x16xbf16>, vector<2x8x16xf32> -> vector<2x8x16xf32>
    %136 = arith.truncf %135 : vector<2x8x16xf32> to vector<2x8x16xbf16>
    %cst_49 = arith.constant dense<0.000000e+00> : vector<2x8x32xf32>
    %137 = tpu.matmul %136, %100, %cst_49 {dimension_numbers = #tpu.dot_dimension_numbers<[2], [1], [1], [2], [0, 0, 0, 1, 1, 2], [0], [0]>} : vector<2x8x16xbf16>, vector<2x16x32xbf16>, vector<2x8x32xf32> -> vector<2x8x32xf32>
    %cst_50 = arith.constant dense<0.000000e+00> : vector<8x32xf32>
    %138 = vector.multi_reduction <add>, %137, %cst_50 [0] : vector<2x8x32xf32> to vector<8x32xf32>
    %139 = vector.broadcast %102 : vector<1x32xf32> to vector<8x32xf32>
    %140 = arith.addf %138, %139 : vector<8x32xf32>
    %141 = arith.addf %72, %140 : vector<8x32xf32>
    %c0_51 = arith.constant 0 : index
    %c0_52 = arith.constant 0 : index
    %c0_53 = arith.constant 0 : index
    %142 = vector.load %arg11[%c0_51, %c0_52, %c0_53] : memref<1x1x32xf32, #tpu.memory_space<vmem>>, vector<1x1x32xf32>
    %143 = vector.shape_cast %142 : vector<1x1x32xf32> to vector<1x32xf32>
    %cst_54 = arith.constant dense<0.000000e+00> : vector<8xf32>
    %144 = vector.multi_reduction <add>, %141, %cst_54 [1] : vector<8x32xf32> to vector<8xf32>
    %145 = vector.shape_cast %144 : vector<8xf32> to vector<8x1xf32>
    %cst_55 = arith.constant 3.200000e+01 : f32
    %146 = vector.broadcast %cst_55 : f32 to vector<8x1xf32>
    %147 = arith.divf %145, %146 : vector<8x1xf32>
    %148 = vector.broadcast %147 : vector<8x1xf32> to vector<8x32xf32>
    %149 = arith.subf %141, %148 : vector<8x32xf32>
    %150 = vector.broadcast %147 : vector<8x1xf32> to vector<8x32xf32>
    %151 = arith.subf %141, %150 : vector<8x32xf32>
    %152 = arith.mulf %149, %151 : vector<8x32xf32>
    %cst_56 = arith.constant dense<0.000000e+00> : vector<8xf32>
    %153 = vector.multi_reduction <add>, %152, %cst_56 [1] : vector<8x32xf32> to vector<8xf32>
    %154 = vector.shape_cast %153 : vector<8xf32> to vector<8x1xf32>
    %cst_57 = arith.constant 3.200000e+01 : f32
    %155 = vector.broadcast %cst_57 : f32 to vector<8x1xf32>
    %156 = arith.divf %154, %155 : vector<8x1xf32>
    %157 = vector.broadcast %147 : vector<8x1xf32> to vector<8x32xf32>
    %158 = arith.subf %141, %157 : vector<8x32xf32>
    %cst_58 = arith.constant 9.99999974E-6 : f32
    %159 = vector.broadcast %cst_58 : f32 to vector<8x1xf32>
    %160 = arith.addf %156, %159 : vector<8x1xf32>
    %161 = math.rsqrt %160 : vector<8x1xf32>
    %162 = vector.broadcast %161 : vector<8x1xf32> to vector<8x32xf32>
    %163 = arith.mulf %158, %162 : vector<8x32xf32>
    %164 = vector.broadcast %143 : vector<1x32xf32> to vector<8x32xf32>
    %165 = arith.mulf %163, %164 : vector<8x32xf32>
    %166 = arith.truncf %165 : vector<8x32xf32> to vector<8x32xbf16>
    %c0_59 = arith.constant 0 : index
    %c0_60 = arith.constant 0 : index
    %c0_61 = arith.constant 0 : index
    %167 = vector.load %arg12[%c0_59, %c0_60, %c0_61] : memref<1x32x64xbf16, #tpu.memory_space<vmem>>, vector<1x32x64xbf16>
    %168 = vector.shape_cast %167 : vector<1x32x64xbf16> to vector<32x64xbf16>
    %cst_62 = arith.constant dense<0.000000e+00> : vector<8x64xf32>
    %169 = tpu.matmul %166, %168, %cst_62 {dimension_numbers = #tpu.dot_dimension_numbers<[1], [0], [0], [1], [0, 0, 1, 1], [], []>} : vector<8x32xbf16>, vector<32x64xbf16>, vector<8x64xf32> -> vector<8x64xf32>
    %c0_63 = arith.constant 0 : index
    %c0_64 = arith.constant 0 : index
    %c0_65 = arith.constant 0 : index
    %170 = vector.load %arg13[%c0_63, %c0_64, %c0_65] : memref<1x1x64xf32, #tpu.memory_space<vmem>>, vector<1x1x64xf32>
    %171 = vector.shape_cast %170 : vector<1x1x64xf32> to vector<1x64xf32>
    %172 = vector.broadcast %171 : vector<1x64xf32> to vector<8x64xf32>
    %173 = arith.addf %169, %172 : vector<8x64xf32>
    %cst_66 = arith.constant 0.000000e+00 : f32
    %174 = vector.broadcast %cst_66 : f32 to vector<8x64xf32>
    %175 = arith.maximumf %173, %174 : vector<8x64xf32>
    %176 = arith.truncf %175 : vector<8x64xf32> to vector<8x64xbf16>
    %c0_67 = arith.constant 0 : index
    %c0_68 = arith.constant 0 : index
    %c0_69 = arith.constant 0 : index
    %177 = vector.load %arg14[%c0_67, %c0_68, %c0_69] : memref<1x64x32xbf16, #tpu.memory_space<vmem>>, vector<1x64x32xbf16>
    %178 = vector.shape_cast %177 : vector<1x64x32xbf16> to vector<64x32xbf16>
    %cst_70 = arith.constant dense<0.000000e+00> : vector<8x32xf32>
    %179 = tpu.matmul %176, %178, %cst_70 {dimension_numbers = #tpu.dot_dimension_numbers<[1], [0], [0], [1], [0, 0, 1, 1], [], []>} : vector<8x64xbf16>, vector<64x32xbf16>, vector<8x32xf32> -> vector<8x32xf32>
    %c0_71 = arith.constant 0 : index
    %c0_72 = arith.constant 0 : index
    %c0_73 = arith.constant 0 : index
    %180 = vector.load %arg15[%c0_71, %c0_72, %c0_73] : memref<1x1x32xf32, #tpu.memory_space<vmem>>, vector<1x1x32xf32>
    %181 = vector.shape_cast %180 : vector<1x1x32xf32> to vector<1x32xf32>
    %182 = vector.broadcast %181 : vector<1x32xf32> to vector<8x32xf32>
    %183 = arith.addf %179, %182 : vector<8x32xf32>
    %184 = arith.addf %141, %165 : vector<8x32xf32>
    %185 = arith.addf %184, %183 : vector<8x32xf32>
    %c0_74 = arith.constant 0 : index
    %c0_75 = arith.constant 0 : index
    %186 = vector.load %arg18[%c0_74, %c0_75] : memref<8x32xf32, #tpu.memory_space<vmem>>, vector<8x32xf32>
    tpu.vector_store %arg18[%c0_74, %c0_75], %185 {strides = array<i32>} : memref<8x32xf32, #tpu.memory_space<vmem>>, vector<8x32xf32>,
    %c1_i32 = arith.constant 1 : i32
    %187 = arith.cmpi eq, %arg1, %c1_i32 : i32
    %188 = arith.extui %187 : i1 to i32
    %c0_i32_76 = arith.constant 0 : i32
    %189 = arith.cmpi ne, %188, %c0_i32_76 : i32
    scf.if %189 {
      %c0_77 = arith.constant 0 : index
      %c0_78 = arith.constant 0 : index
      %190 = vector.load %arg16[%c0_77, %c0_78] : memref<1x32xf32, #tpu.memory_space<vmem>>, vector<1x32xf32>
      %cst_79 = arith.constant dense<0.000000e+00> : vector<8xf32>
      %191 = vector.multi_reduction <add>, %185, %cst_79 [1] : vector<8x32xf32> to vector<8xf32>
      %192 = vector.shape_cast %191 : vector<8xf32> to vector<8x1xf32>
      %cst_80 = arith.constant 3.200000e+01 : f32
      %193 = vector.broadcast %cst_80 : f32 to vector<8x1xf32>
      %194 = arith.divf %192, %193 : vector<8x1xf32>
      %195 = vector.broadcast %194 : vector<8x1xf32> to vector<8x32xf32>
      %196 = arith.subf %185, %195 : vector<8x32xf32>
      %197 = vector.broadcast %194 : vector<8x1xf32> to vector<8x32xf32>
      %198 = arith.subf %185, %197 : vector<8x32xf32>
      %199 = arith.mulf %196, %198 : vector<8x32xf32>
      %cst_81 = arith.constant dense<0.000000e+00> : vector<8xf32>
      %200 = vector.multi_reduction <add>, %199, %cst_81 [1] : vector<8x32xf32> to vector<8xf32>
      %201 = vector.shape_cast %200 : vector<8xf32> to vector<8x1xf32>
      %cst_82 = arith.constant 3.200000e+01 : f32
      %202 = vector.broadcast %cst_82 : f32 to vector<8x1xf32>
      %203 = arith.divf %201, %202 : vector<8x1xf32>
      %204 = vector.broadcast %194 : vector<8x1xf32> to vector<8x32xf32>
      %205 = arith.subf %185, %204 : vector<8x32xf32>
      %cst_83 = arith.constant 9.99999974E-6 : f32
      %206 = vector.broadcast %cst_83 : f32 to vector<8x1xf32>
      %207 = arith.addf %203, %206 : vector<8x1xf32>
      %208 = math.rsqrt %207 : vector<8x1xf32>
      %209 = vector.broadcast %208 : vector<8x1xf32> to vector<8x32xf32>
      %210 = arith.mulf %205, %209 : vector<8x32xf32>
      %211 = vector.broadcast %190 : vector<1x32xf32> to vector<8x32xf32>
      %212 = arith.mulf %210, %211 : vector<8x32xf32>
      %c0_84 = arith.constant 0 : index
      %c0_85 = arith.constant 0 : index
      %c0_86 = arith.constant 0 : index
      %213 = vector.load %arg17[%c0_84, %c0_85, %c0_86] : memref<1x8x32xf32, #tpu.memory_space<vmem>>, vector<1x8x32xf32>
      %214 = vector.shape_cast %213 : vector<1x8x32xf32> to vector<8x32xf32>
      %215 = vector.shape_cast %212 : vector<8x32xf32> to vector<1x8x32xf32>
      tpu.vector_store %arg17[%c0_84, %c0_85, %c0_86], %215 {strides = array<i32>} : memref<1x8x32xf32, #tpu.memory_space<vmem>>, vector<1x8x32xf32>,
    } else {
    }
    return
  }
  func.func @transform_0(%arg0: i32, %arg1: i32) -> (i32, i32, i32) {
    %c0_i32 = arith.constant 0 : i32
    %c0_i32_0 = arith.constant 0 : i32
    %c0_i32_1 = arith.constant 0 : i32
    return %arg0, %c0_i32, %c0_i32_0 : i32, i32, i32
  }
  func.func @transform_1(%arg0: i32, %arg1: i32) -> (i32, i32, i32) {
    %c0_i32 = arith.constant 0 : i32
    %c0_i32_0 = arith.constant 0 : i32
    %c0_i32_1 = arith.constant 0 : i32
    return %arg1, %c0_i32, %c0_i32_0 : i32, i32, i32
  }
  func.func @transform_2(%arg0: i32, %arg1: i32) -> (i32, i32, i32) {
    %c0_i32 = arith.constant 0 : i32
    %c0_i32_0 = arith.constant 0 : i32
    %c0_i32_1 = arith.constant 0 : i32
    return %arg1, %c0_i32, %c0_i32_0 : i32, i32, i32
  }
  func.func @transform_3(%arg0: i32, %arg1: i32) -> (i32, i32, i32, i32) {
    %c0_i32 = arith.constant 0 : i32
    %c0_i32_0 = arith.constant 0 : i32
    %c0_i32_1 = arith.constant 0 : i32
    %c0_i32_2 = arith.constant 0 : i32
    return %arg1, %c0_i32, %c0_i32_0, %c0_i32_1 : i32, i32, i32, i32
  }
  func.func @transform_4(%arg0: i32, %arg1: i32) -> (i32, i32, i32) {
    %c0_i32 = arith.constant 0 : i32
    %c0_i32_0 = arith.constant 0 : i32
    %c0_i32_1 = arith.constant 0 : i32
    return %arg1, %c0_i32, %c0_i32_0 : i32, i32, i32
  }
  func.func @transform_5(%arg0: i32, %arg1: i32) -> (i32, i32, i32) {
    %c0_i32 = arith.constant 0 : i32
    %c0_i32_0 = arith.constant 0 : i32
    %c0_i32_1 = arith.constant 0 : i32
    return %arg1, %c0_i32, %c0_i32_0 : i32, i32, i32
  }
  func.func @transform_6(%arg0: i32, %arg1: i32) -> (i32, i32, i32) {
    %c0_i32 = arith.constant 0 : i32
    %c0_i32_0 = arith.constant 0 : i32
    %c0_i32_1 = arith.constant 0 : i32
    return %arg1, %c0_i32, %c0_i32_0 : i32, i32, i32
  }
  func.func @transform_7(%arg0: i32, %arg1: i32) -> (i32, i32, i32, i32) {
    %c0_i32 = arith.constant 0 : i32
    %c0_i32_0 = arith.constant 0 : i32
    %c0_i32_1 = arith.constant 0 : i32
    %c0_i32_2 = arith.constant 0 : i32
    return %arg1, %c0_i32, %c0_i32_0, %c0_i32_1 : i32, i32, i32, i32
  }
  func.func @transform_8(%arg0: i32, %arg1: i32) -> (i32, i32, i32) {
    %c0_i32 = arith.constant 0 : i32
    %c0_i32_0 = arith.constant 0 : i32
    %c0_i32_1 = arith.constant 0 : i32
    return %arg1, %c0_i32, %c0_i32_0 : i32, i32, i32
  }
  func.func @transform_9(%arg0: i32, %arg1: i32) -> (i32, i32, i32) {
    %c0_i32 = arith.constant 0 : i32
    %c0_i32_0 = arith.constant 0 : i32
    %c0_i32_1 = arith.constant 0 : i32
    return %arg1, %c0_i32, %c0_i32_0 : i32, i32, i32
  }
  func.func @transform_10(%arg0: i32, %arg1: i32) -> (i32, i32, i32) {
    %c0_i32 = arith.constant 0 : i32
    %c0_i32_0 = arith.constant 0 : i32
    %c0_i32_1 = arith.constant 0 : i32
    return %arg1, %c0_i32, %c0_i32_0 : i32, i32, i32
  }
  func.func @transform_11(%arg0: i32, %arg1: i32) -> (i32, i32, i32) {
    %c0_i32 = arith.constant 0 : i32
    %c0_i32_0 = arith.constant 0 : i32
    %c0_i32_1 = arith.constant 0 : i32
    return %arg1, %c0_i32, %c0_i32_0 : i32, i32, i32
  }
  func.func @transform_12(%arg0: i32, %arg1: i32) -> (i32, i32, i32) {
    %c0_i32 = arith.constant 0 : i32
    %c0_i32_0 = arith.constant 0 : i32
    %c0_i32_1 = arith.constant 0 : i32
    return %arg1, %c0_i32, %c0_i32_0 : i32, i32, i32
  }
  func.func @transform_13(%arg0: i32, %arg1: i32) -> (i32, i32, i32) {
    %c0_i32 = arith.constant 0 : i32
    %c0_i32_0 = arith.constant 0 : i32
    %c0_i32_1 = arith.constant 0 : i32
    return %arg1, %c0_i32, %c0_i32_0 : i32, i32, i32
  }
  func.func @transform_14(%arg0: i32, %arg1: i32) -> (i32, i32) {
    %c0_i32 = arith.constant 0 : i32
    %c0_i32_0 = arith.constant 0 : i32
    %c0_i32_1 = arith.constant 0 : i32
    return %c0_i32, %c0_i32_0 : i32, i32
  }
  func.func @transform_15(%arg0: i32, %arg1: i32) -> (i32, i32, i32) {
    %c0_i32 = arith.constant 0 : i32
    %c0_i32_0 = arith.constant 0 : i32
    %c0_i32_1 = arith.constant 0 : i32
    return %arg0, %c0_i32, %c0_i32_0 : i32, i32, i32
  }
}

</mosaic_0001>

<llo_original>
// kernel: tpu_custom_call.1
$region0: #{tpu_custom_call.1}
  #allocation0 [shape = 'u32[]', space=smem, size = 0x4, offset = 0x4, fixed_abs, tag = 'smem constant byte address 0x4 - core index']
  #allocation1 [shape = 'u32[72,128]{1,0:T(1,128)}', space=vmem, size = 0x9000, scoped, tag = 'internal scratch']
  #allocation2 [shape = 'f32[8,32]{1,0:T(8,128)}', space=vmem, size = 0x1000, scoped, tag = 'scratch operand']
  %s0 = inlined_call_operand.hbm [shape: f32[2,8,32], index: 0, kind: input, shape index: {}]
  %s1 = inlined_call_operand.hbm [shape: f32[2,1,32], index: 1, kind: input, shape index: {}]
  %s2 = inlined_call_operand.vmem [shape: bf16[2,32,96], index: 2, kind: input, shape index: {}]
  %s3 = inlined_call_operand.vmem [shape: bf16[2,2,16,32], index: 3, kind: input, shape index: {}]
  %s4 = inlined_call_operand.vmem [shape: f32[2,1,32], index: 4, kind: input, shape index: {}]
  %s5 = inlined_call_operand.hbm [shape: f32[2,1,32], index: 5, kind: input, shape index: {}]
  %s6 = inlined_call_operand.vmem [shape: bf16[2,32,96], index: 6, kind: input, shape index: {}]
  %s7 = inlined_call_operand.hbm [shape: bf16[2,2,16,32], index: 7, kind: input, shape index: {}]
  %s8 = inlined_call_operand.vmem [shape: f32[2,1,32], index: 8, kind: input, shape index: {}]
  %s9 = inlined_call_operand.vmem [shape: f32[2,1,32], index: 9, kind: input, shape index: {}]
  %s10 = inlined_call_operand.hbm [shape: bf16[2,32,64], index: 10, kind: input, shape index: {}]
  %s11 = inlined_call_operand.vmem [shape: f32[2,1,64], index: 11, kind: input, shape index: {}]
  %s12 = inlined_call_operand.vmem [shape: bf16[2,64,32], index: 12, kind: input, shape index: {}]
  %s13 = inlined_call_operand.vmem [shape: f32[2,1,32], index: 13, kind: input, shape index: {}]
  %s14 = inlined_call_operand.vmem [shape: f32[1,32], index: 14, kind: input, shape index: {}]
  %s15 = inlined_call_operand.hbm [shape: f32[2,8,32], index: 15, kind: output, shape index: {}]
  %s16 = sld [smem:[#allocation0]]
  $region121: #{tpu_custom_call.1} parent=0
    _
  %s18 = ssub.s32 1, %s16
  %s19 = scalar_select 0, %s18, %s16
  $region1: #{tpu_custom_call.1} parent=0
    #allocation3 [shape = 'u8[8192]{0}', space=vmem, size = 0x2000, scoped, tag = 'input window, operand 0']
    #allocation4 [shape = 's32[2]{0}', space=sflag, size = 0x8, scoped, tag = 'scoped memory for tpu_custom_call.1']
    #allocation5 [shape = 's32[2]{0}', space=sflag, size = 0x8, scoped, tag = 'scoped memory for tpu_custom_call.1']
    #allocation6 [shape = 'u8[1024]{0}', space=vmem, size = 0x400, scoped, tag = 'input window, operand 1']
    #allocation7 [shape = 's32[2]{0}', space=sflag, size = 0x8, scoped, tag = 'scoped memory for tpu_custom_call.1']
    #allocation8 [shape = 'u8[1024]{0}', space=vmem, size = 0x400, scoped, tag = 'input window, operand 5']
    #allocation9 [shape = 'u8[16384]{0}', space=vmem, size = 0x4000, scoped, tag = 'input window, operand 7']
    #allocation10 [shape = 's32[2]{0}', space=sflag, size = 0x8, scoped, tag = 'scoped memory for tpu_custom_call.1']
    #allocation11 [shape = 'u8[16384]{0}', space=vmem, size = 0x4000, scoped, tag = 'input window, operand 10']
    #allocation12 [shape = 'u8[8192]{0}', space=vmem, size = 0x2000, scoped, tag = 'output window, operand 0']
    %20 = vsyncpa [#allocation4], 0
    %s21 = scalar_lea.sflag [#allocation4], 1
    %22 = vsyncpa %s21, 0
    %23 = vsyncpa [#allocation7], 0
    %s24 = scalar_lea.sflag [#allocation7], 1
    %25 = vsyncpa %s24, 0
    %26 = vsyncpa [#allocation10], 0
    %s27 = scalar_lea.sflag [#allocation10], 1
    %28 = vsyncpa %s27, 0
    %29 = vsyncpa [#allocation5], 0
    %s30 = scalar_lea.sflag [#allocation5], 1
    %31 = vsyncpa %s30, 0
    loop: start=0, step=1, limit=6
    $region2: #{tpu_custom_call.1} parent=1 // loop_pre_header
      _
    $region3: #{tpu_custom_call.1} parent=1 // loop_header
      %s33 = sphi 0, %s37
      %p34 = scmp.ge.s32.totalorder %s33, 6
      %s40 = sphi 0, %s52
      %s41 = sphi 0, %s48
      %s42 = sphi 0, %s40
      %s43 = sphi 0, %s41
      %s44 = sphi 0, %s42
      %s45 = sphi 0, %s43
      %s55 = sphi 0, %s57
      %s58 = sphi 0, %s55
      %s59 = sphi 0, %s58
      %s75 = sphi 0, %s59
      %s81 = sphi 0, %s83
      %s84 = sphi 0, %s81
      %s85 = sphi 0, %s84
      %s101 = sphi 0, %s85
      %s107 = sphi 0, %s109
      %s110 = sphi 0, %s107
      %s111 = sphi 0, %s110
      %s127 = sphi 0, %s111
      %s133 = sphi 0, %s135
      %s136 = sphi 0, %s133
      %s137 = sphi 0, %s136
      %s153 = sphi 0, %s137
      %s159 = sphi 0, %s161
      %s162 = sphi 0, %s159
      %s163 = sphi 0, %s162
      %s179 = sphi 0, %s163
      %s185 = sphi 0, %s187
      %s188 = sphi 0, %s185
      %s189 = sphi 0, %s188
      %s205 = sphi 0, %s189
      %s211 = sphi 0, %s213
      %s214 = sphi 0, %s211
      %s215 = sphi 0, %s214
      %s231 = sphi 0, %s215
      %s237 = sphi 0, %s239
      %s240 = sphi 0, %s237
      %s241 = sphi 0, %s240
      %s257 = sphi 0, %s241
      %s263 = sphi 0, %s265
      %s266 = sphi 0, %s263
      %s267 = sphi 0, %s266
      %s283 = sphi 0, %s267
      %s289 = sphi 0, %s291
      %s292 = sphi 0, %s289
      %s293 = sphi 0, %s292
      %s309 = sphi 0, %s293
      %s315 = sphi 0, %s317
      %s318 = sphi 0, %s315
      %s319 = sphi 0, %s318
      %s335 = sphi 0, %s319
      %s341 = sphi 0, %s343
      %s344 = sphi 0, %s341
      %s345 = sphi 0, %s344
      %s361 = sphi 0, %s345
      %s367 = sphi 0, %s369
      %s370 = sphi 0, %s367
      %s371 = sphi 0, %s370
      %s387 = sphi 0, %s371
      %s393 = sphi 0, %s395
      %s396 = sphi 0, %s393
      %s397 = sphi 0, %s396
      %s413 = sphi 0, %s397
      %s417 = sphi 0, %s417
      %s419 = sphi 0, %s417
      %s420 = sphi 0, %s419
      %s434 = sphi 0, %s420
      %s440 = sphi 0, %s442
      %s443 = sphi 0, %s440
      %s444 = sphi 0, %s443
      %s460 = sphi 0, %s444
    $region4: #{tpu_custom_call.1} parent=1 // loop_header_branch
      %36 = sbr.rel (%p34) target = $region8
    $region5: #{tpu_custom_call.1} parent=1 // loop_body
      %s38 = ssub.s32 %s33, 1
      %s39 = ssub.s32 %s33, 2
      %s46 = sadd.s32 1, %s41
      %p47 = scmp.ge.s32.totalorder %s46, 2
      %s48 = scalar_select %p47, 0, %s46
      %s49 = sadd.s32 1, %s40
      %s50 = scalar_select %p47, %s49, %s40
      %p51 = scmp.ge.s32.totalorder %s50, 2
      %s52 = scalar_select %p51, 0, %s50
      %s53 = ssub.s32 %s40, %s52
      %p54 = scmp.eq.s32.totalorder %s53, 0
      %s56 = sadd.s32 %s55, 1
      %s57 = scalar_select %p54, %s55, %s56
      %p60 = pneg %p54
      %p61 = scmp.eq.s32.totalorder %s33, 3
      %p62 = por %p60, %p61
      %p63 = scmp.ne.s32.totalorder %s55, %s58
      %p64 = scmp.eq.s32.totalorder %s33, 0
      %p65 = por %p63, %p64
      %p66 = scmp.ne.s32.totalorder %s55, %s58
      %p67 = scmp.eq.s32.totalorder %s38, 3
      %p68 = por %p66, %p67
      %p69 = scmp.ne.s32.totalorder %s58, %s59
      %p70 = scmp.eq.s32.totalorder %s38, 0
      %p71 = por %p69, %p70
      %p72 = scmp.ne.s32.totalorder %s58, %s59
      %p73 = scmp.eq.s32.totalorder %s39, 3
      %p74 = por %p72, %p73
      %p76 = scmp.ne.s32.totalorder %s59, %s75
      %p77 = scmp.eq.s32.totalorder %s39, 0
      %p78 = por %p76, %p77
      %s79 = ssub.s32 %s41, %s48
      %p80 = scmp.eq.s32.totalorder %s79, 0
      %s82 = sadd.s32 %s81, 1
      %s83 = scalar_select %p80, %s81, %s82
      %p86 = pneg %p80
      %p87 = scmp.eq.s32.totalorder %s33, 3
      %p88 = por %p86, %p87
      %p89 = scmp.ne.s32.totalorder %s81, %s84
      %p90 = scmp.eq.s32.totalorder %s33, 0
      %p91 = por %p89, %p90
      %p92 = scmp.ne.s32.totalorder %s81, %s84
      %p93 = scmp.eq.s32.totalorder %s38, 3
      %p94 = por %p92, %p93
      %p95 = scmp.ne.s32.totalorder %s84, %s85
      %p96 = scmp.eq.s32.totalorder %s38, 0
      %p97 = por %p95, %p96
      %p98 = scmp.ne.s32.totalorder %s84, %s85
      %p99 = scmp.eq.s32.totalorder %s39, 3
      %p100 = por %p98, %p99
      %p102 = scmp.ne.s32.totalorder %s85, %s101
      %p103 = scmp.eq.s32.totalorder %s39, 0
      %p104 = por %p102, %p103
      %s105 = ssub.s32 %s41, %s48
      %p106 = scmp.eq.s32.totalorder %s105, 0
      %s108 = sadd.s32 %s107, 1
      %s109 = scalar_select %p106, %s107, %s108
      %p112 = pneg %p106
      %p113 = scmp.eq.s32.totalorder %s33, 3
      %p114 = por %p112, %p113
      %p115 = scmp.ne.s32.totalorder %s107, %s110
      %p116 = scmp.eq.s32.totalorder %s33, 0
      %p117 = por %p115, %p116
      %p118 = scmp.ne.s32.totalorder %s107, %s110
      %p119 = scmp.eq.s32.totalorder %s38, 3
      %p120 = por %p118, %p119
      %p121 = scmp.ne.s32.totalorder %s110, %s111
      %p122 = scmp.eq.s32.totalorder %s38, 0
      %p123 = por %p121, %p122
      %p124 = scmp.ne.s32.totalorder %s110, %s111
      %p125 = scmp.eq.s32.totalorder %s39, 3
      %p126 = por %p124, %p125
      %p128 = scmp.ne.s32.totalorder %s111, %s127
      %p129 = scmp.eq.s32.totalorder %s39, 0
      %p130 = por %p128, %p129
      %s131 = ssub.s32 %s41, %s48
      %p132 = scmp.eq.s32.totalorder %s131, 0
      %s134 = sadd.s32 %s133, 1
      %s135 = scalar_select %p132, %s133, %s134
      %p138 = pneg %p132
      %p139 = scmp.eq.s32.totalorder %s33, 3
      %p140 = por %p138, %p139
      %p141 = scmp.ne.s32.totalorder %s133, %s136
      %p142 = scmp.eq.s32.totalorder %s33, 0
      %p143 = por %p141, %p142
      %p144 = scmp.ne.s32.totalorder %s133, %s136
      %p145 = scmp.eq.s32.totalorder %s38, 3
      %p146 = por %p144, %p145
      %p147 = scmp.ne.s32.totalorder %s136, %s137
      %p148 = scmp.eq.s32.totalorder %s38, 0
      %p149 = por %p147, %p148
      %p150 = scmp.ne.s32.totalorder %s136, %s137
      %p151 = scmp.eq.s32.totalorder %s39, 3
      %p152 = por %p150, %p151
      %p154 = scmp.ne.s32.totalorder %s137, %s153
      %p155 = scmp.eq.s32.totalorder %s39, 0
      %p156 = por %p154, %p155
      %s157 = ssub.s32 %s41, %s48
      %p158 = scmp.eq.s32.totalorder %s157, 0
      %s160 = sadd.s32 %s159, 1
      %s161 = scalar_select %p158, %s159, %s160
      %p164 = pneg %p158
      %p165 = scmp.eq.s32.totalorder %s33, 3
      %p166 = por %p164, %p165
      %p167 = scmp.ne.s32.totalorder %s159, %s162
      %p168 = scmp.eq.s32.totalorder %s33, 0
      %p169 = por %p167, %p168
      %p170 = scmp.ne.s32.totalorder %s159, %s162
      %p171 = scmp.eq.s32.totalorder %s38, 3
      %p172 = por %p170, %p171
      %p173 = scmp.ne.s32.totalorder %s162, %s163
      %p174 = scmp.eq.s32.totalorder %s38, 0
      %p175 = por %p173, %p174
      %p176 = scmp.ne.s32.totalorder %s162, %s163
      %p177 = scmp.eq.s32.totalorder %s39, 3
      %p178 = por %p176, %p177
      %p180 = scmp.ne.s32.totalorder %s163, %s179
      %p181 = scmp.eq.s32.totalorder %s39, 0
      %p182 = por %p180, %p181
      %s183 = ssub.s32 %s41, %s48
      %p184 = scmp.eq.s32.totalorder %s183, 0
      %s186 = sadd.s32 %s185, 1
      %s187 = scalar_select %p184, %s185, %s186
      %p190 = pneg %p184
      %p191 = scmp.eq.s32.totalorder %s33, 3
      %p192 = por %p190, %p191
      %p193 = scmp.ne.s32.totalorder %s185, %s188
      %p194 = scmp.eq.s32.totalorder %s33, 0
      %p195 = por %p193, %p194
      %p196 = scmp.ne.s32.totalorder %s185, %s188
      %p197 = scmp.eq.s32.totalorder %s38, 3
      %p198 = por %p196, %p197
      %p199 = scmp.ne.s32.totalorder %s188, %s189
      %p200 = scmp.eq.s32.totalorder %s38, 0
      %p201 = por %p199, %p200
      %p202 = scmp.ne.s32.totalorder %s188, %s189
      %p203 = scmp.eq.s32.totalorder %s39, 3
      %p204 = por %p202, %p203
      %p206 = scmp.ne.s32.totalorder %s189, %s205
      %p207 = scmp.eq.s32.totalorder %s39, 0
      %p208 = por %p206, %p207
      %s209 = ssub.s32 %s41, %s48
      %p210 = scmp.eq.s32.totalorder %s209, 0
      %s212 = sadd.s32 %s211, 1
      %s213 = scalar_select %p210, %s211, %s212
      %p216 = pneg %p210
      %p217 = scmp.eq.s32.totalorder %s33, 3
      %p218 = por %p216, %p217
      %p219 = scmp.ne.s32.totalorder %s211, %s214
      %p220 = scmp.eq.s32.totalorder %s33, 0
      %p221 = por %p219, %p220
      %p222 = scmp.ne.s32.totalorder %s211, %s214
      %p223 = scmp.eq.s32.totalorder %s38, 3
      %p224 = por %p222, %p223
      %p225 = scmp.ne.s32.totalorder %s214, %s215
      %p226 = scmp.eq.s32.totalorder %s38, 0
      %p227 = por %p225, %p226
      %p228 = scmp.ne.s32.totalorder %s214, %s215
      %p229 = scmp.eq.s32.totalorder %s39, 3
      %p230 = por %p228, %p229
      %p232 = scmp.ne.s32.totalorder %s215, %s231
      %p233 = scmp.eq.s32.totalorder %s39, 0
      %p234 = por %p232, %p233
      %s235 = ssub.s32 %s41, %s48
      %p236 = scmp.eq.s32.totalorder %s235, 0
      %s238 = sadd.s32 %s237, 1
      %s239 = scalar_select %p236, %s237, %s238
      %p242 = pneg %p236
      %p243 = scmp.eq.s32.totalorder %s33, 3
      %p244 = por %p242, %p243
      %p245 = scmp.ne.s32.totalorder %s237, %s240
      %p246 = scmp.eq.s32.totalorder %s33, 0
      %p247 = por %p245, %p246
      %p248 = scmp.ne.s32.totalorder %s237, %s240
      %p249 = scmp.eq.s32.totalorder %s38, 3
      %p250 = por %p248, %p249
      %p251 = scmp.ne.s32.totalorder %s240, %s241
      %p252 = scmp.eq.s32.totalorder %s38, 0
      %p253 = por %p251, %p252
      %p254 = scmp.ne.s32.totalorder %s240, %s241
      %p255 = scmp.eq.s32.totalorder %s39, 3
      %p256 = por %p254, %p255
      %p258 = scmp.ne.s32.totalorder %s241, %s257
      %p259 = scmp.eq.s32.totalorder %s39, 0
      %p260 = por %p258, %p259
      %s261 = ssub.s32 %s41, %s48
      %p262 = scmp.eq.s32.totalorder %s261, 0
      %s264 = sadd.s32 %s263, 1
      %s265 = scalar_select %p262, %s263, %s264
      %p268 = pneg %p262
      %p269 = scmp.eq.s32.totalorder %s33, 3
      %p270 = por %p268, %p269
      %p271 = scmp.ne.s32.totalorder %s263, %s266
      %p272 = scmp.eq.s32.totalorder %s33, 0
      %p273 = por %p271, %p272
      %p274 = scmp.ne.s32.totalorder %s263, %s266
      %p275 = scmp.eq.s32.totalorder %s38, 3
      %p276 = por %p274, %p275
      %p277 = scmp.ne.s32.totalorder %s266, %s267
      %p278 = scmp.eq.s32.totalorder %s38, 0
      %p279 = por %p277, %p278
      %p280 = scmp.ne.s32.totalorder %s266, %s267
      %p281 = scmp.eq.s32.totalorder %s39, 3
      %p282 = por %p280, %p281
      %p284 = scmp.ne.s32.totalorder %s267, %s283
      %p285 = scmp.eq.s32.totalorder %s39, 0
      %p286 = por %p284, %p285
      %s287 = ssub.s32 %s41, %s48
      %p288 = scmp.eq.s32.totalorder %s287, 0
      %s290 = sadd.s32 %s289, 1
      %s291 = scalar_select %p288, %s289, %s290
      %p294 = pneg %p288
      %p295 = scmp.eq.s32.totalorder %s33, 3
      %p296 = por %p294, %p295
      %p297 = scmp.ne.s32.totalorder %s289, %s292
      %p298 = scmp.eq.s32.totalorder %s33, 0
      %p299 = por %p297, %p298
      %p300 = scmp.ne.s32.totalorder %s289, %s292
      %p301 = scmp.eq.s32.totalorder %s38, 3
      %p302 = por %p300, %p301
      %p303 = scmp.ne.s32.totalorder %s292, %s293
      %p304 = scmp.eq.s32.totalorder %s38, 0
      %p305 = por %p303, %p304
      %p306 = scmp.ne.s32.totalorder %s292, %s293
      %p307 = scmp.eq.s32.totalorder %s39, 3
      %p308 = por %p306, %p307
      %p310 = scmp.ne.s32.totalorder %s293, %s309
      %p311 = scmp.eq.s32.totalorder %s39, 0
      %p312 = por %p310, %p311
      %s313 = ssub.s32 %s41, %s48
      %p314 = scmp.eq.s32.totalorder %s313, 0
      %s316 = sadd.s32 %s315, 1
      %s317 = scalar_select %p314, %s315, %s316
      %p320 = pneg %p314
      %p321 = scmp.eq.s32.totalorder %s33, 3
      %p322 = por %p320, %p321
      %p323 = scmp.ne.s32.totalorder %s315, %s318
      %p324 = scmp.eq.s32.totalorder %s33, 0
      %p325 = por %p323, %p324
      %p326 = scmp.ne.s32.totalorder %s315, %s318
      %p327 = scmp.eq.s32.totalorder %s38, 3
      %p328 = por %p326, %p327
      %p329 = scmp.ne.s32.totalorder %s318, %s319
      %p330 = scmp.eq.s32.totalorder %s38, 0
      %p331 = por %p329, %p330
      %p332 = scmp.ne.s32.totalorder %s318, %s319
      %p333 = scmp.eq.s32.totalorder %s39, 3
      %p334 = por %p332, %p333
      %p336 = scmp.ne.s32.totalorder %s319, %s335
      %p337 = scmp.eq.s32.totalorder %s39, 0
      %p338 = por %p336, %p337
      %s339 = ssub.s32 %s41, %s48
      %p340 = scmp.eq.s32.totalorder %s339, 0
      %s342 = sadd.s32 %s341, 1
      %s343 = scalar_select %p340, %s341, %s342
      %p346 = pneg %p340
      %p347 = scmp.eq.s32.totalorder %s33, 3
      %p348 = por %p346, %p347
      %p349 = scmp.ne.s32.totalorder %s341, %s344
      %p350 = scmp.eq.s32.totalorder %s33, 0
      %p351 = por %p349, %p350
      %p352 = scmp.ne.s32.totalorder %s341, %s344
      %p353 = scmp.eq.s32.totalorder %s38, 3
      %p354 = por %p352, %p353
      %p355 = scmp.ne.s32.totalorder %s344, %s345
      %p356 = scmp.eq.s32.totalorder %s38, 0
      %p357 = por %p355, %p356
      %p358 = scmp.ne.s32.totalorder %s344, %s345
      %p359 = scmp.eq.s32.totalorder %s39, 3
      %p360 = por %p358, %p359
      %p362 = scmp.ne.s32.totalorder %s345, %s361
      %p363 = scmp.eq.s32.totalorder %s39, 0
      %p364 = por %p362, %p363
      %s365 = ssub.s32 %s41, %s48
      %p366 = scmp.eq.s32.totalorder %s365, 0
      %s368 = sadd.s32 %s367, 1
      %s369 = scalar_select %p366, %s367, %s368
      %p372 = pneg %p366
      %p373 = scmp.eq.s32.totalorder %s33, 3
      %p374 = por %p372, %p373
      %p375 = scmp.ne.s32.totalorder %s367, %s370
      %p376 = scmp.eq.s32.totalorder %s33, 0
      %p377 = por %p375, %p376
      %p378 = scmp.ne.s32.totalorder %s367, %s370
      %p379 = scmp.eq.s32.totalorder %s38, 3
      %p380 = por %p378, %p379
      %p381 = scmp.ne.s32.totalorder %s370, %s371
      %p382 = scmp.eq.s32.totalorder %s38, 0
      %p383 = por %p381, %p382
      %p384 = scmp.ne.s32.totalorder %s370, %s371
      %p385 = scmp.eq.s32.totalorder %s39, 3
      %p386 = por %p384, %p385
      %p388 = scmp.ne.s32.totalorder %s371, %s387
      %p389 = scmp.eq.s32.totalorder %s39, 0
      %p390 = por %p388, %p389
      %s391 = ssub.s32 %s41, %s48
      %p392 = scmp.eq.s32.totalorder %s391, 0
      %s394 = sadd.s32 %s393, 1
      %s395 = scalar_select %p392, %s393, %s394
      %p398 = pneg %p392
      %p399 = scmp.eq.s32.totalorder %s33, 3
      %p400 = por %p398, %p399
      %p401 = scmp.ne.s32.totalorder %s393, %s396
      %p402 = scmp.eq.s32.totalorder %s33, 0
      %p403 = por %p401, %p402
      %p404 = scmp.ne.s32.totalorder %s393, %s396
      %p405 = scmp.eq.s32.totalorder %s38, 3
      %p406 = por %p404, %p405
      %p407 = scmp.ne.s32.totalorder %s396, %s397
      %p408 = scmp.eq.s32.totalorder %s38, 0
      %p409 = por %p407, %p408
      %p410 = scmp.ne.s32.totalorder %s396, %s397
      %p411 = scmp.eq.s32.totalorder %s39, 3
      %p412 = por %p410, %p411
      %p414 = scmp.ne.s32.totalorder %s397, %s413
      %p415 = scmp.eq.s32.totalorder %s39, 0
      %p416 = por %p414, %p415
      %s418 = sadd.s32 %s417, 1
      %p421 = scmp.eq.s32.totalorder %s33, 3
      %p422 = scmp.ne.s32.totalorder %s417, %s419
      %p423 = scmp.eq.s32.totalorder %s33, 0
      %p424 = por %p422, %p423
      %p425 = scmp.ne.s32.totalorder %s417, %s419
      %p426 = scmp.eq.s32.totalorder %s38, 3
      %p427 = por %p425, %p426
      %p428 = scmp.ne.s32.totalorder %s419, %s420
      %p429 = scmp.eq.s32.totalorder %s38, 0
      %p430 = por %p428, %p429
      %p431 = scmp.ne.s32.totalorder %s419, %s420
      %p432 = scmp.eq.s32.totalorder %s39, 3
      %p433 = por %p431, %p432
      %p435 = scmp.ne.s32.totalorder %s420, %s434
      %p436 = scmp.eq.s32.totalorder %s39, 0
      %p437 = por %p435, %p436
      %s438 = ssub.s32 %s40, %s52
      %p439 = scmp.eq.s32.totalorder %s438, 0
      %s441 = sadd.s32 %s440, 1
      %s442 = scalar_select %p439, %s440, %s441
      %p445 = pneg %p439
      %p446 = scmp.eq.s32.totalorder %s33, 3
      %p447 = por %p445, %p446
      %p448 = scmp.ne.s32.totalorder %s440, %s443
      %p449 = scmp.eq.s32.totalorder %s33, 0
      %p450 = por %p448, %p449
      %p451 = scmp.ne.s32.totalorder %s440, %s443
      %p452 = scmp.eq.s32.totalorder %s38, 3
      %p453 = por %p451, %p452
      %p454 = scmp.ne.s32.totalorder %s443, %s444
      %p455 = scmp.eq.s32.totalorder %s38, 0
      %p456 = por %p454, %p455
      %p457 = scmp.ne.s32.totalorder %s443, %s444
      %p458 = scmp.eq.s32.totalorder %s39, 3
      %p459 = por %p457, %p458
      %p461 = scmp.ne.s32.totalorder %s444, %s460
      %p462 = scmp.eq.s32.totalorder %s39, 0
      %p463 = por %p461, %p462
      %p464 = scmp.le.s32.totalorder 1, %s33
      %p465 = scmp.lt.s32.totalorder %s33, 5
      %p466 = pnand %p464, %p465
      %p467 = pneg %p466
      // Predicated region
      $region9: #{tpu_custom_call.1} parent=5 // pred_check
        _
      $region10: #{tpu_custom_call.1} parent=5 // pred_check_branch
        %469 = sbr.rel (%p466) target = $region12
      $region11: #{tpu_custom_call.1} parent=5 // pred_region
        %s470 = ssub.s32 %s33, 1
        // Predicated region
        $region13: #{tpu_custom_call.1} parent=11 // pred_check
          %p471 = pneg %p430
        $region14: #{tpu_custom_call.1} parent=11 // pred_check_branch
          %473 = sbr.rel (%p471) target = $region16
        $region15: #{tpu_custom_call.1} parent=11 // pred_region
          _
        $region16: #{tpu_custom_call.1} parent=11 // pred_fallthru
          _
      $region12: #{tpu_custom_call.1} parent=5 // pred_fallthru
        _
      %p474 = scmp.lt.s32.totalorder %s33, 4
      // Predicated region
      $region17: #{tpu_custom_call.1} parent=5 // pred_check
        %p475 = pneg %p474
      $region18: #{tpu_custom_call.1} parent=5 // pred_check_branch
        %477 = sbr.rel (%p475) target = $region20
      $region19: #{tpu_custom_call.1} parent=5 // pred_region
        // Predicated region
        $region21: #{tpu_custom_call.1} parent=19 // pred_check
          %p478 = pneg %p65
        $region22: #{tpu_custom_call.1} parent=19 // pred_check_branch
          %480 = sbr.rel (%p478) target = $region24
        $region23: #{tpu_custom_call.1} parent=19 // pred_region
          %s481 = sand.u32 %s55, 1
          %s482 = scalar_lea.sflag [#allocation4], %s481
          %s483 = sand.u32 %s55, 1
          %s484 = smul.addr %s483, 8
          %s485 = scalar_lea.vmem [#allocation3], %s484
          %487 = vsyncadd %s482, 0
          %s488 = smul.addr %s40, 8
          %s489 = scalar_lea.hbm %s0, %s488
          %s491 = sshll.u32 %s489, 4
          %s492 = int_to_ptr.hbm [resolvable:$true] %s491
          %s493 = sshll.u32 %s485, 4
          %s494 = int_to_ptr.vmem [resolvable:$true] %s493
          %496 = dma.hbm_to_vmem [thread:$0]  %s492, 128, %s494, %s482
        $region24: #{tpu_custom_call.1} parent=19 // pred_fallthru
          _
        // Predicated region
        $region25: #{tpu_custom_call.1} parent=19 // pred_check
          %p497 = pneg %p91
        $region26: #{tpu_custom_call.1} parent=19 // pred_check_branch
          %499 = sbr.rel (%p497) target = $region28
        $region27: #{tpu_custom_call.1} parent=19 // pred_region
          %s500 = sand.u32 %s33, 1
          %s501 = scalar_lea.sflag [#allocation7], %s500
          %s502 = sand.u32 %s81, 1
          %s503 = scalar_lea.vmem [#allocation6], %s502
          %505 = vsyncadd %s501, 0
          %s506 = scalar_lea.hbm %s1, %s41
          %s508 = sshll.u32 %s506, 4
          %s509 = int_to_ptr.hbm [resolvable:$true] %s508
          %s510 = sshll.u32 %s503, 4
          %s511 = int_to_ptr.vmem [resolvable:$true] %s510
          %513 = dma.hbm_to_vmem [thread:$0]  %s509, 16, %s511, %s501
        $region28: #{tpu_custom_call.1} parent=19 // pred_fallthru
          _
        // Predicated region
        $region29: #{tpu_custom_call.1} parent=19 // pred_check
          %p514 = pneg %p117
        $region30: #{tpu_custom_call.1} parent=19 // pred_check_branch
          %516 = sbr.rel (%p514) target = $region32
        $region31: #{tpu_custom_call.1} parent=19 // pred_region
          %p517 = scmp.lt.s32.totalorder %s41, 1
          %s518 = scalar_select %p517, %s41, 1
          %s519 = smul.addr %s518, 4
          %s520 = smul.addr %s519, 4
          %s521 = scalar_lea.vmem %s2, %s520
        $region32: #{tpu_custom_call.1} parent=19 // pred_fallthru
          _
        // Predicated region
        $region33: #{tpu_custom_call.1} parent=19 // pred_check
          %p522 = pneg %p143
        $region34: #{tpu_custom_call.1} parent=19 // pred_check_branch
          %524 = sbr.rel (%p522) target = $region36
        $region35: #{tpu_custom_call.1} parent=19 // pred_region
          %p525 = scmp.lt.s32.totalorder %s41, 1
          %s526 = scalar_select %p525, %s41, 1
          %s527 = smul.addr %s526, 4
          %s528 = smul.addr %s527, 4
          %s529 = scalar_lea.vmem %s3, %s528
        $region36: #{tpu_custom_call.1} parent=19 // pred_fallthru
          _
        // Predicated region
        $region37: #{tpu_custom_call.1} parent=19 // pred_check
          %p530 = pneg %p169
        $region38: #{tpu_custom_call.1} parent=19 // pred_check_branch
          %532 = sbr.rel (%p530) target = $region40
        $region39: #{tpu_custom_call.1} parent=19 // pred_region
          %p533 = scmp.lt.s32.totalorder %s41, 1
          %s534 = scalar_select %p533, %s41, 1
          %s535 = scalar_lea.vmem %s4, %s534
        $region40: #{tpu_custom_call.1} parent=19 // pred_fallthru
          _
        // Predicated region
        $region41: #{tpu_custom_call.1} parent=19 // pred_check
          %p536 = pneg %p195
        $region42: #{tpu_custom_call.1} parent=19 // pred_check_branch
          %538 = sbr.rel (%p536) target = $region44
        $region43: #{tpu_custom_call.1} parent=19 // pred_region
          %s539 = sand.u32 %s33, 1
          %s540 = scalar_lea.sflag [#allocation7], %s539
          %s541 = sand.u32 %s185, 1
          %s542 = scalar_lea.vmem [#allocation8], %s541
          %544 = vsyncadd %s540, 0
          %s545 = scalar_lea.hbm %s5, %s41
          %s547 = sshll.u32 %s545, 4
          %s548 = int_to_ptr.hbm [resolvable:$true] %s547
          %s549 = sshll.u32 %s542, 4
          %s550 = int_to_ptr.vmem [resolvable:$true] %s549
          %552 = dma.hbm_to_vmem [thread:$0]  %s548, 16, %s550, %s540
        $region44: #{tpu_custom_call.1} parent=19 // pred_fallthru
          _
        // Predicated region
        $region45: #{tpu_custom_call.1} parent=19 // pred_check
          %p553 = pneg %p221
        $region46: #{tpu_custom_call.1} parent=19 // pred_check_branch
          %555 = sbr.rel (%p553) target = $region48
        $region47: #{tpu_custom_call.1} parent=19 // pred_region
          %p556 = scmp.lt.s32.totalorder %s41, 1
          %s557 = scalar_select %p556, %s41, 1
          %s558 = smul.addr %s557, 4
          %s559 = smul.addr %s558, 4
          %s560 = scalar_lea.vmem %s6, %s559
        $region48: #{tpu_custom_call.1} parent=19 // pred_fallthru
          _
        // Predicated region
        $region49: #{tpu_custom_call.1} parent=19 // pred_check
          %p561 = pneg %p247
        $region50: #{tpu_custom_call.1} parent=19 // pred_check_branch
          %563 = sbr.rel (%p561) target = $region52
        $region51: #{tpu_custom_call.1} parent=19 // pred_region
          %s564 = sand.u32 %s33, 1
          %s565 = scalar_lea.sflag [#allocation10], %s564
          %s566 = sand.u32 %s237, 1
          %s567 = smul.addr %s566, 16
          %s568 = scalar_lea.vmem [#allocation9], %s567
          %570 = vsyncadd %s565, 0
          %s571 = smul.addr %s41, 4
          %s572 = smul.addr %s571, 4
          %s573 = scalar_lea.hbm %s7, %s572
          %s574 = sshll.u32 %s573, 4
          %s575 = int_to_ptr.hbm [resolvable:$true] %s574
          %s576 = sshll.u32 %s568, 4
          %s577 = int_to_ptr.vmem [resolvable:$true] %s576
          %582 = dma.hbm_to_vmem [thread:$0]  %s575, 256, %s577, %s565, 64, 64, 4
        $region52: #{tpu_custom_call.1} parent=19 // pred_fallthru
          _
        // Predicated region
        $region53: #{tpu_custom_call.1} parent=19 // pred_check
          %p583 = pneg %p273
        $region54: #{tpu_custom_call.1} parent=19 // pred_check_branch
          %585 = sbr.rel (%p583) target = $region56
        $region55: #{tpu_custom_call.1} parent=19 // pred_region
          %p586 = scmp.lt.s32.totalorder %s41, 1
          %s587 = scalar_select %p586, %s41, 1
          %s588 = scalar_lea.vmem %s8, %s587
        $region56: #{tpu_custom_call.1} parent=19 // pred_fallthru
          _
        // Predicated region
        $region57: #{tpu_custom_call.1} parent=19 // pred_check
          %p589 = pneg %p299
        $region58: #{tpu_custom_call.1} parent=19 // pred_check_branch
          %591 = sbr.rel (%p589) target = $region60
        $region59: #{tpu_custom_call.1} parent=19 // pred_region
          %p592 = scmp.lt.s32.totalorder %s41, 1
          %s593 = scalar_select %p592, %s41, 1
          %s594 = scalar_lea.vmem %s9, %s593
        $region60: #{tpu_custom_call.1} parent=19 // pred_fallthru
          _
        // Predicated region
        $region61: #{tpu_custom_call.1} parent=19 // pred_check
          %p595 = pneg %p325
        $region62: #{tpu_custom_call.1} parent=19 // pred_check_branch
          %597 = sbr.rel (%p595) target = $region64
        $region63: #{tpu_custom_call.1} parent=19 // pred_region
          %s598 = sand.u32 %s33, 1
          %s599 = scalar_lea.sflag [#allocation10], %s598
          %s600 = sand.u32 %s315, 1
          %s601 = smul.addr %s600, 16
          %s602 = scalar_lea.vmem [#allocation11], %s601
          %604 = vsyncadd %s599, 0
          %s605 = smul.addr %s41, 4
          %s606 = smul.addr %s605, 4
          %s607 = scalar_lea.hbm %s10, %s606
          %s608 = sshll.u32 %s607, 4
          %s609 = int_to_ptr.hbm [resolvable:$true] %s608
          %s610 = sshll.u32 %s602, 4
          %s611 = int_to_ptr.vmem [resolvable:$true] %s610
          %616 = dma.hbm_to_vmem [thread:$0]  %s609, 256, %s611, %s599, 64, 64, 4
        $region64: #{tpu_custom_call.1} parent=19 // pred_fallthru
          _
        // Predicated region
        $region65: #{tpu_custom_call.1} parent=19 // pred_check
          %p617 = pneg %p351
        $region66: #{tpu_custom_call.1} parent=19 // pred_check_branch
          %619 = sbr.rel (%p617) target = $region68
        $region67: #{tpu_custom_call.1} parent=19 // pred_region
          %p620 = scmp.lt.s32.totalorder %s41, 1
          %s621 = scalar_select %p620, %s41, 1
          %s622 = scalar_lea.vmem %s11, %s621
        $region68: #{tpu_custom_call.1} parent=19 // pred_fallthru
          _
        // Predicated region
        $region69: #{tpu_custom_call.1} parent=19 // pred_check
          %p623 = pneg %p377
        $region70: #{tpu_custom_call.1} parent=19 // pred_check_branch
          %625 = sbr.rel (%p623) target = $region72
        $region71: #{tpu_custom_call.1} parent=19 // pred_region
          %p626 = scmp.lt.s32.totalorder %s41, 1
          %s627 = scalar_select %p626, %s41, 1
          %s628 = smul.addr %s627, 8
          %s629 = smul.addr %s628, 4
          %s630 = scalar_lea.vmem %s12, %s629
        $region72: #{tpu_custom_call.1} parent=19 // pred_fallthru
          _
        // Predicated region
        $region73: #{tpu_custom_call.1} parent=19 // pred_check
          %p631 = pneg %p403
        $region74: #{tpu_custom_call.1} parent=19 // pred_check_branch
          %633 = sbr.rel (%p631) target = $region76
        $region75: #{tpu_custom_call.1} parent=19 // pred_region
          %p634 = scmp.lt.s32.totalorder %s41, 1
          %s635 = scalar_select %p634, %s41, 1
          %s636 = scalar_lea.vmem %s13, %s635
        $region76: #{tpu_custom_call.1} parent=19 // pred_fallthru
          _
      $region20: #{tpu_custom_call.1} parent=5 // pred_fallthru
        _
      %p637 = scmp.le.s32.totalorder 1, %s33
      %p638 = scmp.lt.s32.totalorder %s33, 5
      %p639 = pnand %p637, %p638
      %p640 = pneg %p639
      // Predicated region
      $region77: #{tpu_custom_call.1} parent=5 // pred_check
        _
      $region78: #{tpu_custom_call.1} parent=5 // pred_check_branch
        %642 = sbr.rel (%p639) target = $region80
      $region79: #{tpu_custom_call.1} parent=5 // pred_region
        %s643 = ssub.s32 %s33, 1
        %s644 = sand.u32 %s58, 1
        %s645 = scalar_lea.sflag [#allocation4], %s644
        %s646 = sand.u32 %s58, 1
        %s647 = smul.addr %s646, 8
        %s648 = scalar_lea.vmem [#allocation3], %s647
        // Predicated region
        $region81: #{tpu_custom_call.1} parent=79 // pred_check
          %p649 = pneg %p71
        $region82: #{tpu_custom_call.1} parent=79 // pred_check_branch
          %651 = sbr.rel (%p649) target = $region84
        $region83: #{tpu_custom_call.1} parent=79 // pred_region
          %653 = dma.done %s645, 128
        $region84: #{tpu_custom_call.1} parent=79 // pred_fallthru
          _
        %s654 = sand.u32 %s38, 1
        %s655 = scalar_lea.sflag [#allocation7], %s654
        %s656 = sand.u32 %s84, 1
        %s657 = scalar_lea.vmem [#allocation6], %s656
        // Predicated region
        $region85: #{tpu_custom_call.1} parent=79 // pred_check
          %p658 = pneg %p97
        $region86: #{tpu_custom_call.1} parent=79 // pred_check_branch
          %660 = sbr.rel (%p658) target = $region88
        $region87: #{tpu_custom_call.1} parent=79 // pred_region
          %662 = dma.done %s655, 16
        $region88: #{tpu_custom_call.1} parent=79 // pred_fallthru
          _
        %s663 = sand.u32 %s38, 1
        %s664 = scalar_lea.sflag [#allocation7], %s663
        %s665 = sand.u32 %s188, 1
        %s666 = scalar_lea.vmem [#allocation8], %s665
        // Predicated region
        $region89: #{tpu_custom_call.1} parent=79 // pred_check
          %p667 = pneg %p201
        $region90: #{tpu_custom_call.1} parent=79 // pred_check_branch
          %669 = sbr.rel (%p667) target = $region92
        $region91: #{tpu_custom_call.1} parent=79 // pred_region
          %671 = dma.done %s664, 16
        $region92: #{tpu_custom_call.1} parent=79 // pred_fallthru
          _
        %s672 = sand.u32 %s38, 1
        %s673 = scalar_lea.sflag [#allocation10], %s672
        %s674 = sand.u32 %s240, 1
        %s675 = smul.addr %s674, 16
        %s676 = scalar_lea.vmem [#allocation9], %s675
        // Predicated region
        $region93: #{tpu_custom_call.1} parent=79 // pred_check
          %p677 = pneg %p253
        $region94: #{tpu_custom_call.1} parent=79 // pred_check_branch
          %679 = sbr.rel (%p677) target = $region96
        $region95: #{tpu_custom_call.1} parent=79 // pred_region
          %681 = dma.done %s673, 256
        $region96: #{tpu_custom_call.1} parent=79 // pred_fallthru
          _
        %s682 = sand.u32 %s38, 1
        %s683 = scalar_lea.sflag [#allocation10], %s682
        %s684 = sand.u32 %s318, 1
        %s685 = smul.addr %s684, 16
        %s686 = scalar_lea.vmem [#allocation11], %s685
        // Predicated region
        $region97: #{tpu_custom_call.1} parent=79 // pred_check
          %p687 = pneg %p331
        $region98: #{tpu_custom_call.1} parent=79 // pred_check_branch
          %689 = sbr.rel (%p687) target = $region100
        $region99: #{tpu_custom_call.1} parent=79 // pred_region
          %691 = dma.done %s683, 256
        $region100: #{tpu_custom_call.1} parent=79 // pred_fallthru
          _
        %s692 = sand.u32 %s58, 1
        %s693 = scalar_lea.sflag [#allocation4], %s692
        %s694 = sand.u32 %s58, 1
        %s695 = smul.addr %s694, 8
        %s696 = scalar_lea.vmem [#allocation3], %s695
        %p697 = pneg %p71
        %p698 = pneg %p68
        %s699 = sand.u32 %s38, 1
        %s700 = scalar_lea.sflag [#allocation7], %s699
        %s701 = sand.u32 %s84, 1
        %s702 = scalar_lea.vmem [#allocation6], %s701
        %p703 = pneg %p97
        %p704 = pneg %p94
        %p705 = scmp.lt.s32.totalorder %s43, 1
        %s706 = scalar_select %p705, %s43, 1
        %s707 = smul.addr %s706, 4
        %s708 = smul.addr %s707, 4
        %s709 = scalar_lea.vmem %s2, %s708
        %p710 = pneg %p123
        %p711 = pneg %p120
        %p712 = scmp.lt.s32.totalorder %s43, 1
        %s713 = scalar_select %p712, %s43, 1
        %s714 = smul.addr %s713, 4
        %s715 = smul.addr %s714, 4
        %s716 = scalar_lea.vmem %s3, %s715
        %p717 = pneg %p149
        %p718 = pneg %p146
        %p719 = scmp.lt.s32.totalorder %s43, 1
        %s720 = scalar_select %p719, %s43, 1
        %s721 = scalar_lea.vmem %s4, %s720
        %p722 = pneg %p175
        %p723 = pneg %p172
        %s724 = sand.u32 %s38, 1
        %s725 = scalar_lea.sflag [#allocation7], %s724
        %s726 = sand.u32 %s188, 1
        %s727 = scalar_lea.vmem [#allocation8], %s726
        %p728 = pneg %p201
        %p729 = pneg %p198
        %p730 = scmp.lt.s32.totalorder %s43, 1
        %s731 = scalar_select %p730, %s43, 1
        %s732 = smul.addr %s731, 4
        %s733 = smul.addr %s732, 4
        %s734 = scalar_lea.vmem %s6, %s733
        %p735 = pneg %p227
        %p736 = pneg %p224
        %s737 = sand.u32 %s38, 1
        %s738 = scalar_lea.sflag [#allocation10], %s737
        %s739 = sand.u32 %s240, 1
        %s740 = smul.addr %s739, 16
        %s741 = scalar_lea.vmem [#allocation9], %s740
        %p742 = pneg %p253
        %p743 = pneg %p250
        %p744 = scmp.lt.s32.totalorder %s43, 1
        %s745 = scalar_select %p744, %s43, 1
        %s746 = scalar_lea.vmem %s8, %s745
        %p747 = pneg %p279
        %p748 = pneg %p276
        %p749 = scmp.lt.s32.totalorder %s43, 1
        %s750 = scalar_select %p749, %s43, 1
        %s751 = scalar_lea.vmem %s9, %s750
        %p752 = pneg %p305
        %p753 = pneg %p302
        %s754 = sand.u32 %s38, 1
        %s755 = scalar_lea.sflag [#allocation10], %s754
        %s756 = sand.u32 %s318, 1
        %s757 = smul.addr %s756, 16
        %s758 = scalar_lea.vmem [#allocation11], %s757
        %p759 = pneg %p331
        %p760 = pneg %p328
        %p761 = scmp.lt.s32.totalorder %s43, 1
        %s762 = scalar_select %p761, %s43, 1
        %s763 = scalar_lea.vmem %s11, %s762
        %p764 = pneg %p357
        %p765 = pneg %p354
        %p766 = scmp.lt.s32.totalorder %s43, 1
        %s767 = scalar_select %p766, %s43, 1
        %s768 = smul.addr %s767, 8
        %s769 = smul.addr %s768, 4
        %s770 = scalar_lea.vmem %s12, %s769
        %p771 = pneg %p383
        %p772 = pneg %p380
        %p773 = scmp.lt.s32.totalorder %s43, 1
        %s774 = scalar_select %p773, %s43, 1
        %s775 = scalar_lea.vmem %s13, %s774
        %p776 = pneg %p409
        %p777 = pneg %p406
        %p778 = pneg %p430
        %p779 = pneg %p427
        %p780 = pneg %p456
        %p781 = pneg %p453
        %s782 = sand.u32 %s443, 1
        %s783 = scalar_lea.sflag [#allocation5], %s782
        %s784 = sand.u32 %s443, 1
        %s785 = smul.addr %s784, 8
        %s786 = scalar_lea.vmem [#allocation12], %s785
        %p787 = scmp.lt.s32.totalorder %s43, 1
        %s788 = scalar_select %p787, %s43, 1
        %s789 = smul.addr %s788, 4
        %s790 = smul.addr %s789, 4
        %s791 = scalar_lea.vmem %s2, %s790
        %p792 = scmp.lt.s32.totalorder %s43, 1
        %s793 = scalar_select %p792, %s43, 1
        %s794 = smul.addr %s793, 4
        %s795 = smul.addr %s794, 4
        %s796 = scalar_lea.vmem %s3, %s795
        %p797 = scmp.lt.s32.totalorder %s43, 1
        %s798 = scalar_select %p797, %s43, 1
        %s799 = scalar_lea.vmem %s4, %s798
        %p800 = scmp.lt.s32.totalorder %s43, 1
        %s801 = scalar_select %p800, %s43, 1
        %s802 = smul.addr %s801, 4
        %s803 = smul.addr %s802, 4
        %s804 = scalar_lea.vmem %s6, %s803
        %p805 = scmp.lt.s32.totalorder %s43, 1
        %s806 = scalar_select %p805, %s43, 1
        %s807 = scalar_lea.vmem %s8, %s806
        %p808 = scmp.lt.s32.totalorder %s43, 1
        %s809 = scalar_select %p808, %s43, 1
        %s810 = scalar_lea.vmem %s9, %s809
        %p811 = scmp.lt.s32.totalorder %s43, 1
        %s812 = scalar_select %p811, %s43, 1
        %s813 = scalar_lea.vmem %s11, %s812
        %p814 = scmp.lt.s32.totalorder %s43, 1
        %s815 = scalar_select %p814, %s43, 1
        %s816 = smul.addr %s815, 8
        %s817 = smul.addr %s816, 4
        %s818 = scalar_lea.vmem %s12, %s817
        %p819 = scmp.lt.s32.totalorder %s43, 1
        %s820 = scalar_select %p819, %s43, 1
        %s821 = scalar_lea.vmem %s13, %s820
        %p823 = scmp.eq.s32.totalorder %s43, 0
        // Predicated region
        $region101: #{tpu_custom_call.1} parent=79 // pred_check
          %p824 = pneg %p823
        $region102: #{tpu_custom_call.1} parent=79 // pred_check_branch
          %826 = sbr.rel (%p824) target = $region104
        $region103: #{tpu_custom_call.1} parent=79 // pred_region
          %v827 = vld [vmem:[%s648] sm:$0xff]
          %vm828 = vcmask 261120
          %829 = vst.msk [vmem:[#allocation2] sm:$0xff] %vm828, %v827
        $region104: #{tpu_custom_call.1} parent=79 // pred_fallthru
          _
        %v830 = vld [vmem:[#allocation2] sm:$0xff]
        %v831 = vld [vmem:[%s657] sm:$0x1]
        %vm832 = vcmask 261120
        %v833 = vsel %vm832, %v830, 0.0
        %834 = vadd.xlane.f32.xlu0 %v833
        %v835 = vpop.xlane.xlu0 %834
        %v836 = vrcp.pop 32.0
        %v837 = vmul.f32 32.0, %v836
        %v838 = vsub.f32 1.0, %v837
        %v839 = vmul.f32 %v836, %v838
        %v840 = vadd.f32 %v836, %v839
        %vm841 = vweird.f32 %v836
        %v842 = vsel %vm841, %v836, %v840
        %v843 = vmul.f32 %v835, %v842
        %v844 = vsub.f32 %v830, %v843
        %v845 = vmul.f32 %v844, %v844
        %v846 = vsel %vm832, %v845, 0.0
        %847 = vadd.xlane.f32.xlu0 %v846
        %v848 = vpop.xlane.xlu0 %847
        %v849 = vmul.f32 %v848, %v842
        %v850 = vadd.f32 %v849, 1e-05
        %v851 = vrsqrt.pop %v850
        %v852 = vmul.f32 %v851, %v850
        %v853 = vmul.f32 %v852, %v851
        %v854 = vmul.f32 0.5, %v853
        %v855 = vsub.f32 1.5, %v854
        %v856 = vmul.f32 %v851, %v855
        %vm857 = vweird.f32 %v850
        %vm858 = vweird.f32 %v851
        %vm859 = vmor %vm857, %vm858
        %v860 = vsel %vm859, %v851, %v856
        %v861 = vmul.f32 %v844, %v860
        %v863 = vperm.slane %v831, 0
        %v865 = vmul.f32 %v861, %v863
        %v866 = vld [vmem:[%s791] sm:$0xf]
        %v867 = vld [vmem:[%s791 + $0x4] sm:$0xf]
        %v868 = vld [vmem:[%s791 + $0x8] sm:$0xf]
        %v869 = vld [vmem:[%s791 + $0xc] sm:$0xf]
        %v870 = vld [vmem:[%s796] sm:$0xf]
        %v871 = vld [vmem:[%s796 + $0x4] sm:$0xf]
        %v872 = vld [vmem:[%s796 + $0x8] sm:$0xf]
        %v873 = vld [vmem:[%s796 + $0xc] sm:$0xf]
        %v874 = vld [vmem:[%s799] sm:$0x1]
        %v875 = vpack.c.bf16 %v865, %v865
        %v880 = vunpack.c.l.b16 %v866
        %v881 = vunpack.c.l.b16 %v867
        %v882 = vunpack.c.l.b16 %v868
        %v883 = vunpack.c.l.b16 %v869
        %v884 = vpack.c.b16 %v881, %v880
        %v885 = vpack.c.b16 %v883, %v882
        %v889 = vsel %vm832, %v875, 0
        %891 = vmatpush.bf16.msra.mxu0 0
        %892 = vmatpush.bf16.msra.mxu0 0
        %893 = vmatpush.bf16.msra.mxu0 0
        %894 = vmatpush.bf16.msra.mxu0 0
        %895 = vmatpush.bf16.msra.mxu0 0
        %896 = vmatpush.bf16.msra.mxu0 0
        %897 = vmatpush.bf16.msra.mxu0 %v885
        %898 = vmatpush.bf16.msra.mxu0 %v884
        %899 = vmatmul.bf16.gmra.mxu0 %v889
        %v900 = vpop.f32.mrf.mxu0
        %v901 = vadd.f32 0.0, %v900
        %v902 = vpop.f32.mrf.mxu0
        %903 = vdwg.mxu0
        %905 = vrot.lane.b32.xlu0 %v901, 112
        %v906 = vpop.permute.xlu0 %905
        %v908 = vpack.c.bf16 %v901, %v901
        %v909 = vpack.c.bf16 %v906, %v906
        %v911 = vunpack.c.l.b16 %v908
        %v912 = vpack.c.b16 %v911, %v911
        %913 = vrot.lane.b32.xlu0 %v912, 96
        %v914 = vpop.permute.xlu0 %913
        %vm915 = vcmask 130048
        %v917 = vsel %vm915, %v908, 0
        %v920 = vsel %vm915, %v914, 0
        %922 = vmatpush.bf16.xpose.msra.mxu0 0
        %923 = vmatpush.bf16.xpose.msra.mxu0 0
        %924 = vmatpush.bf16.xpose.msra.mxu0 0
        %925 = vmatpush.bf16.xpose.msra.mxu0 0
        %926 = vmatpush.bf16.xpose.msra.mxu0 0
        %927 = vmatpush.bf16.xpose.msra.mxu0 0
        %928 = vmatpush.bf16.xpose.msra.mxu0 0
        %929 = vmatpush.bf16.xpose.msra.mxu0 %v920
        %930 = vmatmul.bf16.gmra.mxu0 %v917
        %v931 = vpop.f32.mrf.mxu0
        %v932 = vadd.f32 0.0, %v931
        %v933 = vpop.f32.mrf.mxu0
        %934 = vdwg.mxu0
        %v936 = vunpack.c.l.b16 %v909
        %v937 = vpack.c.b16 %v936, %v936
        %938 = vrot.lane.b32.xlu0 %v937, 96
        %v939 = vpop.permute.xlu0 %938
        %v941 = vsel %vm915, %v909, 0
        %v944 = vsel %vm915, %v939, 0
        %946 = vmatpush.bf16.xpose.msra.mxu0 0
        %947 = vmatpush.bf16.xpose.msra.mxu0 0
        %948 = vmatpush.bf16.xpose.msra.mxu0 0
        %949 = vmatpush.bf16.xpose.msra.mxu0 0
        %950 = vmatpush.bf16.xpose.msra.mxu0 0
        %951 = vmatpush.bf16.xpose.msra.mxu0 0
        %952 = vmatpush.bf16.xpose.msra.mxu0 0
        %953 = vmatpush.bf16.xpose.msra.mxu0 %v944
        %954 = vmatmul.bf16.gmra.mxu0 %v941
        %v955 = vpop.f32.mrf.mxu0
        %v956 = vadd.f32 0.0, %v955
        %v957 = vpop.f32.mrf.mxu0
        %958 = vdwg.mxu0
        %vm959 = vcmask 64512
        %v960 = vsel %vm959, %v932, -inf
        %961 = vmax.xlane.f32.xlu0 %v960
        %v962 = vpop.xlane.xlu0 %961
        %v963 = vsel %vm959, %v956, -inf
        %964 = vmax.xlane.f32.xlu0 %v963
        %v965 = vpop.xlane.xlu0 %964
        %v966 = vsub.f32 %v932, %v962
        %v967 = vsub.f32 %v956, %v965
        %v968 = vmul.f32 %v966, 1.442695
        %v969 = vpow.pop %v968
        %v970 = vmul.f32 %v967, 1.442695
        %v971 = vpow.pop %v970
        %v972 = vsel %vm959, %v969, 0.0
        %973 = vadd.xlane.f32.xlu0 %v972
        %v974 = vpop.xlane.xlu0 %973
        %v975 = vsel %vm959, %v971, 0.0
        %976 = vadd.xlane.f32.xlu0 %v975
        %v977 = vpop.xlane.xlu0 %976
        %v978 = vrcp.pop %v974
        %v979 = vrcp.pop %v977
        %v980 = vmul.f32 %v969, %v978
        %v981 = vmul.f32 %v971, %v979
        %v982 = vpack.c.bf16 %v980, %v980
        %v983 = vpack.c.bf16 %v981, %v981
        %984 = vrot.lane.b32.xlu0 %v912, 64
        %v985 = vpop.permute.xlu0 %984
        %v987 = vsel %vm959, %v982, 0
        %vm989 = vcmask 1043456
        %v991 = vsel %vm989, %v985, 0
        %993 = vmatpush.bf16.msra.mxu0 0
        %994 = vmatpush.bf16.msra.mxu0 0
        %995 = vmatpush.bf16.msra.mxu0 0
        %996 = vmatpush.bf16.msra.mxu0 0
        %997 = vmatpush.bf16.msra.mxu0 0
        %998 = vmatpush.bf16.msra.mxu0 0
        %999 = vmatpush.bf16.msra.mxu0 0
        %1000 = vmatpush.bf16.msra.mxu0 %v991
        %1001 = vmatmul.bf16.gmra.mxu0 %v987
        %v1002 = vpop.f32.mrf.mxu0
        %v1003 = vadd.f32 0.0, %v1002
        %v1004 = vpop.f32.mrf.mxu0
        %1005 = vdwg.mxu0
        %1006 = vrot.lane.b32.xlu0 %v937, 64
        %v1007 = vpop.permute.xlu0 %1006
        %v1009 = vsel %vm959, %v983, 0
        %v1012 = vsel %vm989, %v1007, 0
        %1014 = vmatpush.bf16.msra.mxu0 0
        %1015 = vmatpush.bf16.msra.mxu0 0
        %1016 = vmatpush.bf16.msra.mxu0 0
        %1017 = vmatpush.bf16.msra.mxu0 0
        %1018 = vmatpush.bf16.msra.mxu0 0
        %1019 = vmatpush.bf16.msra.mxu0 0
        %1020 = vmatpush.bf16.msra.mxu0 0
        %1021 = vmatpush.bf16.msra.mxu0 %v1012
        %1022 = vmatmul.bf16.gmra.mxu0 %v1009
        %v1023 = vpop.f32.mrf.mxu0
        %v1024 = vadd.f32 0.0, %v1023
        %v1025 = vpop.f32.mrf.mxu0
        %1026 = vdwg.mxu0
        %v1027 = vpack.c.bf16 %v1003, %v1003
        %v1028 = vpack.c.bf16 %v1024, %v1024
        %v1031 = vunpack.c.l.b16 %v870
        %v1032 = vunpack.c.l.b16 %v871
        %v1033 = vpack.c.b16 %v1032, %v1031
        %v1036 = vsel %vm915, %v1027, 0
        %1038 = vmatpush.bf16.msra.mxu0 0
        %1039 = vmatpush.bf16.msra.mxu0 0
        %1040 = vmatpush.bf16.msra.mxu0 0
        %1041 = vmatpush.bf16.msra.mxu0 0
        %1042 = vmatpush.bf16.msra.mxu0 0
        %1043 = vmatpush.bf16.msra.mxu0 0
        %1044 = vmatpush.bf16.msra.mxu0 0
        %1045 = vmatpush.bf16.msra.mxu0 %v1033
        %1046 = vmatmul.bf16.gmra.mxu0 %v1036
        %v1047 = vpop.f32.mrf.mxu0
        %v1048 = vadd.f32 0.0, %v1047
        %v1049 = vpop.f32.mrf.mxu0
        %1050 = vdwg.mxu0
        %v1053 = vunpack.c.l.b16 %v872
        %v1054 = vunpack.c.l.b16 %v873
        %v1055 = vpack.c.b16 %v1054, %v1053
        %v1058 = vsel %vm915, %v1028, 0
        %1060 = vmatpush.bf16.msra.mxu0 0
        %1061 = vmatpush.bf16.msra.mxu0 0
        %1062 = vmatpush.bf16.msra.mxu0 0
        %1063 = vmatpush.bf16.msra.mxu0 0
        %1064 = vmatpush.bf16.msra.mxu0 0
        %1065 = vmatpush.bf16.msra.mxu0 0
        %1066 = vmatpush.bf16.msra.mxu0 0
        %1067 = vmatpush.bf16.msra.mxu0 %v1055
        %1068 = vmatmul.bf16.gmra.mxu0 %v1058
        %v1069 = vpop.f32.mrf.mxu0
        %v1070 = vadd.f32 0.0, %v1069
        %v1071 = vpop.f32.mrf.mxu0
        %1072 = vdwg.mxu0
        %v1073 = vsel %vm832, %v1048, 0.0
        %v1074 = vsel %vm832, %v1070, 0.0
        %v1075 = vadd.f32 %v1073, %v1074
        %v1077 = vperm.slane %v874, 0
        %v1079 = vadd.f32 %v1075, %v1077
        %v1080 = vadd.f32 %v830, %v1079
        %v1081 = vld [vmem:[%s666] sm:$0x1]
        %v1082 = vsel %vm832, %v1080, 0.0
        %1083 = vadd.xlane.f32.xlu0 %v1082
        %v1084 = vpop.xlane.xlu0 %1083
        %v1085 = vmul.f32 %v1084, %v842
        %v1086 = vsub.f32 %v1080, %v1085
        %v1087 = vmul.f32 %v1086, %v1086
        %v1088 = vsel %vm832, %v1087, 0.0
        %1089 = vadd.xlane.f32.xlu0 %v1088
        %v1090 = vpop.xlane.xlu0 %1089
        %v1091 = vmul.f32 %v1090, %v842
        %v1092 = vadd.f32 %v1091, 1e-05
        %v1093 = vrsqrt.pop %v1092
        %v1094 = vmul.f32 %v1093, %v1092
        %v1095 = vmul.f32 %v1094, %v1093
        %v1096 = vmul.f32 0.5, %v1095
        %v1097 = vsub.f32 1.5, %v1096
        %v1098 = vmul.f32 %v1093, %v1097
        %vm1099 = vweird.f32 %v1092
        %vm1100 = vweird.f32 %v1093
        %vm1101 = vmor %vm1099, %vm1100
        %v1102 = vsel %vm1101, %v1093, %v1098
        %v1103 = vmul.f32 %v1086, %v1102
        %v1105 = vperm.slane %v1081, 0
        %v1107 = vmul.f32 %v1103, %v1105
        %v1108 = vld [vmem:[%s804] sm:$0xf]
        %v1109 = vld [vmem:[%s804 + $0x4] sm:$0xf]
        %v1110 = vld [vmem:[%s804 + $0x8] sm:$0xf]
        %v1111 = vld [vmem:[%s804 + $0xc] sm:$0xf]
        %v1112 = vld [vmem:[%s676] sm:$0xf]
        %v1113 = vld [vmem:[%s676 + $0x4] sm:$0xf]
        %v1114 = vld [vmem:[%s676 + $0x8] sm:$0xf]
        %v1115 = vld [vmem:[%s676 + $0xc] sm:$0xf]
        %v1116 = vld [vmem:[%s807] sm:$0x1]
        %v1117 = vpack.c.bf16 %v1107, %v1107
        %v1122 = vunpack.c.l.b16 %v1108
        %v1123 = vunpack.c.l.b16 %v1109
        %v1124 = vunpack.c.l.b16 %v1110
        %v1125 = vunpack.c.l.b16 %v1111
        %v1126 = vpack.c.b16 %v1123, %v1122
        %v1127 = vpack.c.b16 %v1125, %v1124
        %v1131 = vsel %vm832, %v1117, 0
        %1133 = vmatpush.bf16.msra.mxu0 0
        %1134 = vmatpush.bf16.msra.mxu0 0
        %1135 = vmatpush.bf16.msra.mxu0 0
        %1136 = vmatpush.bf16.msra.mxu0 0
        %1137 = vmatpush.bf16.msra.mxu0 0
        %1138 = vmatpush.bf16.msra.mxu0 0
        %1139 = vmatpush.bf16.msra.mxu0 %v1127
        %1140 = vmatpush.bf16.msra.mxu0 %v1126
        %1141 = vmatmul.bf16.gmra.mxu0 %v1131
        %v1142 = vpop.f32.mrf.mxu0
        %v1143 = vadd.f32 0.0, %v1142
        %v1144 = vpop.f32.mrf.mxu0
        %1145 = vdwg.mxu0
        %1147 = vrot.lane.b32.xlu0 %v1143, 112
        %v1148 = vpop.permute.xlu0 %1147
        %v1150 = vpack.c.bf16 %v1143, %v1143
        %v1151 = vpack.c.bf16 %v1148, %v1148
        %v1153 = vunpack.c.l.b16 %v1150
        %v1154 = vpack.c.b16 %v1153, %v1153
        %1155 = vrot.lane.b32.xlu0 %v1154, 96
        %v1156 = vpop.permute.xlu0 %1155
        %v1158 = vsel %vm915, %v1150, 0
        %v1161 = vsel %vm915, %v1156, 0
        %1163 = vmatpush.bf16.xpose.msra.mxu0 0
        %1164 = vmatpush.bf16.xpose.msra.mxu0 0
        %1165 = vmatpush.bf16.xpose.msra.mxu0 0
        %1166 = vmatpush.bf16.xpose.msra.mxu0 0
        %1167 = vmatpush.bf16.xpose.msra.mxu0 0
        %1168 = vmatpush.bf16.xpose.msra.mxu0 0
        %1169 = vmatpush.bf16.xpose.msra.mxu0 0
        %1170 = vmatpush.bf16.xpose.msra.mxu0 %v1161
        %1171 = vmatmul.bf16.gmra.mxu0 %v1158
        %v1172 = vpop.f32.mrf.mxu0
        %v1173 = vadd.f32 0.0, %v1172
        %v1174 = vpop.f32.mrf.mxu0
        %1175 = vdwg.mxu0
        %v1177 = vunpack.c.l.b16 %v1151
        %v1178 = vpack.c.b16 %v1177, %v1177
        %1179 = vrot.lane.b32.xlu0 %v1178, 96
        %v1180 = vpop.permute.xlu0 %1179
        %v1182 = vsel %vm915, %v1151, 0
        %v1185 = vsel %vm915, %v1180, 0
        %1187 = vmatpush.bf16.xpose.msra.mxu0 0
        %1188 = vmatpush.bf16.xpose.msra.mxu0 0
        %1189 = vmatpush.bf16.xpose.msra.mxu0 0
        %1190 = vmatpush.bf16.xpose.msra.mxu0 0
        %1191 = vmatpush.bf16.xpose.msra.mxu0 0
        %1192 = vmatpush.bf16.xpose.msra.mxu0 0
        %1193 = vmatpush.bf16.xpose.msra.mxu0 0
        %1194 = vmatpush.bf16.xpose.msra.mxu0 %v1185
        %1195 = vmatmul.bf16.gmra.mxu0 %v1182
        %v1196 = vpop.f32.mrf.mxu0
        %v1197 = vadd.f32 0.0, %v1196
        %v1198 = vpop.f32.mrf.mxu0
        %1199 = vdwg.mxu0
        %v1200 = vsel %vm959, %v1173, -inf
        %1201 = vmax.xlane.f32.xlu0 %v1200
        %v1202 = vpop.xlane.xlu0 %1201
        %v1203 = vsel %vm959, %v1197, -inf
        %1204 = vmax.xlane.f32.xlu0 %v1203
        %v1205 = vpop.xlane.xlu0 %1204
        %v1206 = vsub.f32 %v1173, %v1202
        %v1207 = vsub.f32 %v1197, %v1205
        %v1208 = vmul.f32 %v1206, 1.442695
        %v1209 = vpow.pop %v1208
        %v1210 = vmul.f32 %v1207, 1.442695
        %v1211 = vpow.pop %v1210
        %v1212 = vsel %vm959, %v1209, 0.0
        %1213 = vadd.xlane.f32.xlu0 %v1212
        %v1214 = vpop.xlane.xlu0 %1213
        %v1215 = vsel %vm959, %v1211, 0.0
        %1216 = vadd.xlane.f32.xlu0 %v1215
        %v1217 = vpop.xlane.xlu0 %1216
        %v1218 = vrcp.pop %v1214
        %v1219 = vrcp.pop %v1217
        %v1220 = vmul.f32 %v1209, %v1218
        %v1221 = vmul.f32 %v1211, %v1219
        %v1222 = vpack.c.bf16 %v1220, %v1220
        %v1223 = vpack.c.bf16 %v1221, %v1221
        %1224 = vrot.lane.b32.xlu0 %v1154, 64
        %v1225 = vpop.permute.xlu0 %1224
        %v1227 = vsel %vm959, %v1222, 0
        %v1230 = vsel %vm989, %v1225, 0
        %1232 = vmatpush.bf16.msra.mxu0 0
        %1233 = vmatpush.bf16.msra.mxu0 0
        %1234 = vmatpush.bf16.msra.mxu0 0
        %1235 = vmatpush.bf16.msra.mxu0 0
        %1236 = vmatpush.bf16.msra.mxu0 0
        %1237 = vmatpush.bf16.msra.mxu0 0
        %1238 = vmatpush.bf16.msra.mxu0 0
        %1239 = vmatpush.bf16.msra.mxu0 %v1230
        %1240 = vmatmul.bf16.gmra.mxu0 %v1227
        %v1241 = vpop.f32.mrf.mxu0
        %v1242 = vadd.f32 0.0, %v1241
        %v1243 = vpop.f32.mrf.mxu0
        %1244 = vdwg.mxu0
        %1245 = vrot.lane.b32.xlu0 %v1178, 64
        %v1246 = vpop.permute.xlu0 %1245
        %v1248 = vsel %vm959, %v1223, 0
        %v1251 = vsel %vm989, %v1246, 0
        %1253 = vmatpush.bf16.msra.mxu0 0
        %1254 = vmatpush.bf16.msra.mxu0 0
        %1255 = vmatpush.bf16.msra.mxu0 0
        %1256 = vmatpush.bf16.msra.mxu0 0
        %1257 = vmatpush.bf16.msra.mxu0 0
        %1258 = vmatpush.bf16.msra.mxu0 0
        %1259 = vmatpush.bf16.msra.mxu0 0
        %1260 = vmatpush.bf16.msra.mxu0 %v1251
        %1261 = vmatmul.bf16.gmra.mxu0 %v1248
        %v1262 = vpop.f32.mrf.mxu0
        %v1263 = vadd.f32 0.0, %v1262
        %v1264 = vpop.f32.mrf.mxu0
        %1265 = vdwg.mxu0
        %v1266 = vpack.c.bf16 %v1242, %v1242
        %v1267 = vpack.c.bf16 %v1263, %v1263
        %v1270 = vunpack.c.l.b16 %v1112
        %v1271 = vunpack.c.l.b16 %v1113
        %v1272 = vpack.c.b16 %v1271, %v1270
        %v1275 = vsel %vm915, %v1266, 0
        %1277 = vmatpush.bf16.msra.mxu0 0
        %1278 = vmatpush.bf16.msra.mxu0 0
        %1279 = vmatpush.bf16.msra.mxu0 0
        %1280 = vmatpush.bf16.msra.mxu0 0
        %1281 = vmatpush.bf16.msra.mxu0 0
        %1282 = vmatpush.bf16.msra.mxu0 0
        %1283 = vmatpush.bf16.msra.mxu0 0
        %1284 = vmatpush.bf16.msra.mxu0 %v1272
        %1285 = vmatmul.bf16.gmra.mxu0 %v1275
        %v1286 = vpop.f32.mrf.mxu0
        %v1287 = vadd.f32 0.0, %v1286
        %v1288 = vpop.f32.mrf.mxu0
        %1289 = vdwg.mxu0
        %v1292 = vunpack.c.l.b16 %v1114
        %v1293 = vunpack.c.l.b16 %v1115
        %v1294 = vpack.c.b16 %v1293, %v1292
        %v1297 = vsel %vm915, %v1267, 0
        %1299 = vmatpush.bf16.msra.mxu0 0
        %1300 = vmatpush.bf16.msra.mxu0 0
        %1301 = vmatpush.bf16.msra.mxu0 0
        %1302 = vmatpush.bf16.msra.mxu0 0
        %1303 = vmatpush.bf16.msra.mxu0 0
        %1304 = vmatpush.bf16.msra.mxu0 0
        %1305 = vmatpush.bf16.msra.mxu0 0
        %1306 = vmatpush.bf16.msra.mxu0 %v1294
        %1307 = vmatmul.bf16.gmra.mxu0 %v1297
        %v1308 = vpop.f32.mrf.mxu0
        %v1309 = vadd.f32 0.0, %v1308
        %v1310 = vpop.f32.mrf.mxu0
        %1311 = vdwg.mxu0
        %v1312 = vsel %vm832, %v1287, 0.0
        %v1313 = vsel %vm832, %v1309, 0.0
        %v1314 = vadd.f32 %v1312, %v1313
        %v1316 = vperm.slane %v1116, 0
        %v1318 = vadd.f32 %v1314, %v1316
        %v1319 = vadd.f32 %v1080, %v1318
        %v1320 = vld [vmem:[%s810] sm:$0x1]
        %v1321 = vsel %vm832, %v1319, 0.0
        %1322 = vadd.xlane.f32.xlu0 %v1321
        %v1323 = vpop.xlane.xlu0 %1322
        %v1324 = vmul.f32 %v1323, %v842
        %v1325 = vsub.f32 %v1319, %v1324
        %v1326 = vmul.f32 %v1325, %v1325
        %v1327 = vsel %vm832, %v1326, 0.0
        %1328 = vadd.xlane.f32.xlu0 %v1327
        %v1329 = vpop.xlane.xlu0 %1328
        %v1330 = vmul.f32 %v1329, %v842
        %v1331 = vadd.f32 %v1330, 1e-05
        %v1332 = vrsqrt.pop %v1331
        %v1333 = vmul.f32 %v1332, %v1331
        %v1334 = vmul.f32 %v1333, %v1332
        %v1335 = vmul.f32 0.5, %v1334
        %v1336 = vsub.f32 1.5, %v1335
        %v1337 = vmul.f32 %v1332, %v1336
        %vm1338 = vweird.f32 %v1331
        %vm1339 = vweird.f32 %v1332
        %vm1340 = vmor %vm1338, %vm1339
        %v1341 = vsel %vm1340, %v1332, %v1337
        %v1342 = vmul.f32 %v1325, %v1341
        %v1344 = vperm.slane %v1320, 0
        %v1346 = vmul.f32 %v1342, %v1344
        %v1347 = vpack.c.bf16 %v1346, %v1346
        %v1348 = vld [vmem:[%s686] sm:$0xf]
        %v1349 = vld [vmem:[%s686 + $0x4] sm:$0xf]
        %v1350 = vld [vmem:[%s686 + $0x8] sm:$0xf]
        %v1351 = vld [vmem:[%s686 + $0xc] sm:$0xf]
        %v1352 = vld [vmem:[%s813] sm:$0x1]
        %v1354 = vperm.slane %v1352, 0
        %v1360 = vunpack.c.l.b16 %v1348
        %v1361 = vunpack.c.l.b16 %v1349
        %v1362 = vunpack.c.l.b16 %v1350
        %v1363 = vunpack.c.l.b16 %v1351
        %v1364 = vpack.c.b16 %v1361, %v1360
        %v1365 = vpack.c.b16 %v1363, %v1362
        %v1369 = vsel %vm832, %v1347, 0
        %1371 = vmatpush.bf16.msra.mxu0 0
        %1372 = vmatpush.bf16.msra.mxu0 0
        %1373 = vmatpush.bf16.msra.mxu0 0
        %1374 = vmatpush.bf16.msra.mxu0 0
        %1375 = vmatpush.bf16.msra.mxu0 0
        %1376 = vmatpush.bf16.msra.mxu0 0
        %1377 = vmatpush.bf16.msra.mxu0 %v1365
        %1378 = vmatpush.bf16.msra.mxu0 %v1364
        %1379 = vmatmul.bf16.gmra.mxu0 %v1369
        %v1380 = vpop.f32.mrf.mxu0
        %v1381 = vadd.f32 %v1354, %v1380
        %v1382 = vpop.f32.mrf.mxu0
        %1383 = vdwg.mxu0
        %v1384 = vmax.f32 %v1381, 0.0
        %v1385 = vpack.c.bf16 %v1384, %v1384
        %v1386 = vld [vmem:[%s818] sm:$0xf]
        %v1387 = vld [vmem:[%s818 + $0x4] sm:$0xf]
        %v1388 = vld [vmem:[%s818 + $0x8] sm:$0xf]
        %v1389 = vld [vmem:[%s818 + $0xc] sm:$0xf]
        %v1390 = vld [vmem:[%s818 + $0x10] sm:$0xf]
        %v1391 = vld [vmem:[%s818 + $0x14] sm:$0xf]
        %v1392 = vld [vmem:[%s818 + $0x18] sm:$0xf]
        %v1393 = vld [vmem:[%s818 + $0x1c] sm:$0xf]
        %v1394 = vld [vmem:[%s821] sm:$0x1]
        %v1396 = vperm.slane %v1394, 0
        %v1406 = vunpack.c.l.b16 %v1386
        %v1407 = vunpack.c.l.b16 %v1387
        %v1408 = vunpack.c.l.b16 %v1388
        %v1409 = vunpack.c.l.b16 %v1389
        %v1410 = vunpack.c.l.b16 %v1390
        %v1411 = vunpack.c.l.b16 %v1391
        %v1412 = vunpack.c.l.b16 %v1392
        %v1413 = vunpack.c.l.b16 %v1393
        %v1414 = vpack.c.b16 %v1407, %v1406
        %v1415 = vpack.c.b16 %v1409, %v1408
        %v1416 = vpack.c.b16 %v1411, %v1410
        %v1417 = vpack.c.b16 %v1413, %v1412
        %vm1422 = vcmask 523264
        %v1424 = vsel %vm1422, %v1385, 0
        %1426 = vmatpush.bf16.msra.mxu0 0
        %1427 = vmatpush.bf16.msra.mxu0 0
        %1428 = vmatpush.bf16.msra.mxu0 0
        %1429 = vmatpush.bf16.msra.mxu0 0
        %1430 = vmatpush.bf16.msra.mxu0 %v1417
        %1431 = vmatpush.bf16.msra.mxu0 %v1416
        %1432 = vmatpush.bf16.msra.mxu0 %v1415
        %1433 = vmatpush.bf16.msra.mxu0 %v1414
        %1434 = vmatmul.bf16.gmra.mxu0 %v1424
        %v1435 = vpop.f32.mrf.mxu0
        %v1436 = vadd.f32 %v1396, %v1435
        %v1437 = vpop.f32.mrf.mxu0
        %1438 = vdwg.mxu0
        %v1439 = vadd.f32 %v1319, %v1346
        %v1440 = vadd.f32 %v1439, %v1436
        %1441 = vst.msk [vmem:[#allocation2] sm:$0xff] %vm832, %v1440
        %p1442 = scmp.eq.s32.totalorder %s43, 1
        // Predicated region
        $region105: #{tpu_custom_call.1} parent=79 // pred_check
          %p1443 = pneg %p1442
        $region106: #{tpu_custom_call.1} parent=79 // pred_check_branch
          %1445 = sbr.rel (%p1443) target = $region108
        $region107: #{tpu_custom_call.1} parent=79 // pred_region
          %v1446 = vld [vmem:[%s14] sm:$0x1]
          %v1447 = vsel %vm832, %v1440, 0.0
          %1448 = vadd.xlane.f32.xlu0 %v1447
          %v1449 = vpop.xlane.xlu0 %1448
          %v1450 = vmul.f32 %v1449, %v842
          %v1451 = vsub.f32 %v1440, %v1450
          %v1452 = vmul.f32 %v1451, %v1451
          %v1453 = vsel %vm832, %v1452, 0.0
          %1454 = vadd.xlane.f32.xlu0 %v1453
          %v1455 = vpop.xlane.xlu0 %1454
          %v1456 = vmul.f32 %v1455, %v842
          %v1457 = vadd.f32 %v1456, 1e-05
          %v1458 = vrsqrt.pop %v1457
          %v1459 = vmul.f32 %v1458, %v1457
          %v1460 = vmul.f32 %v1459, %v1458
          %v1461 = vmul.f32 0.5, %v1460
          %v1462 = vsub.f32 1.5, %v1461
          %v1463 = vmul.f32 %v1458, %v1462
          %vm1464 = vweird.f32 %v1457
          %vm1465 = vweird.f32 %v1458
          %vm1466 = vmor %vm1464, %vm1465
          %v1467 = vsel %vm1466, %v1458, %v1463
          %v1468 = vmul.f32 %v1451, %v1467
          %v1470 = vperm.slane %v1446, 0
          %v1472 = vmul.f32 %v1468, %v1470
          %1473 = vst.msk [vmem:[%s786] sm:$0xff] %vm832, %v1472
        $region108: #{tpu_custom_call.1} parent=79 // pred_fallthru
          _
        %s1474 = sand.u32 %s443, 1
        %s1475 = scalar_lea.sflag [#allocation5], %s1474
        %s1476 = sand.u32 %s443, 1
        %s1477 = smul.addr %s1476, 8
        %s1478 = scalar_lea.vmem [#allocation12], %s1477
        // Predicated region
        $region109: #{tpu_custom_call.1} parent=79 // pred_check
          %p1479 = pneg %p453
        $region110: #{tpu_custom_call.1} parent=79 // pred_check_branch
          %1481 = sbr.rel (%p1479) target = $region112
        $region111: #{tpu_custom_call.1} parent=79 // pred_region
          %1483 = vsyncadd %s1475, 0
          %s1484 = smul.addr %s42, 8
          %s1485 = scalar_lea.hbm %s15, %s1484
          %s1487 = sshll.u32 %s1478, 4
          %s1488 = int_to_ptr.vmem [resolvable:$true] %s1487
          %s1489 = sshll.u32 %s1485, 4
          %s1490 = int_to_ptr.hbm [resolvable:$true] %s1489
          %1492 = dma.vmem_to_hbm [thread:$0]  %s1488, 128, %s1490, %s1475
        $region112: #{tpu_custom_call.1} parent=79 // pred_fallthru
          _
      $region80: #{tpu_custom_call.1} parent=5 // pred_fallthru
        _
      %p1493 = scmp.le.s32.totalorder 2, %s33
      // Predicated region
      $region113: #{tpu_custom_call.1} parent=5 // pred_check
        %p1494 = pneg %p1493
      $region114: #{tpu_custom_call.1} parent=5 // pred_check_branch
        %1496 = sbr.rel (%p1494) target = $region116
      $region115: #{tpu_custom_call.1} parent=5 // pred_region
        %s1497 = ssub.s32 %s33, 2
        // Predicated region
        $region117: #{tpu_custom_call.1} parent=115 // pred_check
          %p1498 = pneg %p459
        $region118: #{tpu_custom_call.1} parent=115 // pred_check_branch
          %1500 = sbr.rel (%p1498) target = $region120
        $region119: #{tpu_custom_call.1} parent=115 // pred_region
          %s1501 = sand.u32 %s444, 1
          %s1502 = scalar_lea.sflag [#allocation5], %s1501
          %s1503 = sand.u32 %s444, 1
          %s1504 = smul.addr %s1503, 8
          %s1505 = scalar_lea.vmem [#allocation12], %s1504
          %1507 = dma.done %s1502, 128
        $region120: #{tpu_custom_call.1} parent=115 // pred_fallthru
          _
      $region116: #{tpu_custom_call.1} parent=5 // pred_fallthru
        _
    $region6: #{tpu_custom_call.1} parent=1 // loop_footer
      %s37 = sadd.s32 1, %s33
    $region7: #{tpu_custom_call.1} parent=1 // loop_footer_branch
      %32 = sbr.rel target = $region3
    $region8: #{tpu_custom_call.1} parent=1 // loop_exit
      _
    %1508 = vsyncpa [#allocation4], 1
    %s1509 = scalar_lea.sflag [#allocation4], 1
    %1510 = vsyncpa %s1509, 1
    %1511 = vsyncpa [#allocation7], 1
    %s1512 = scalar_lea.sflag [#allocation7], 1
    %1513 = vsyncpa %s1512, 1
    %1514 = vsyncpa [#allocation10], 1
    %s1515 = scalar_lea.sflag [#allocation10], 1
    %1516 = vsyncpa %s1515, 1
    %1517 = vsyncpa [#allocation5], 1
    %s1518 = scalar_lea.sflag [#allocation5], 1
    %1519 = vsyncpa %s1518, 1

</llo_original>
